<compile_context>
chip_gen: v7x
topology: tpu7x:2x2x1
jax: 0.10.0
libtpu: 0.0.40
codegen_flags: <defaults>
</compile_context>

<pallas_src>
import functools
import math

import jax
import jax.numpy as jnp
from jax.experimental import pallas as pl
from jax.experimental.pallas import tpu as pltpu


def _layernorm(x, gamma, beta, eps=1e-5):
    mu = jnp.mean(x, axis=-1, keepdims=True)
    var = jnp.mean((x - mu) ** 2, axis=-1, keepdims=True)
    return (x - mu) * jax.lax.rsqrt(var + eps) * gamma + beta


# ----------------------------- Pallas kernel --------------------------------

def stack_encoder_kernel(x_ref, wqkv_ref, bqkv_ref, wo_ref, bo_ref,
                         w1_ref, b1_ref, w2_ref, b2_ref,
                         g1_ref, be1_ref, g2_ref, be2_ref, gf_ref, bf_ref,
                         *out_and_scratch,
                         H, Dh, compute_dtype, output_attention, activation):
    if output_attention:
        out_ref, attn_ref, act_ref = out_and_scratch
    else:
        out_ref, act_ref = out_and_scratch
        attn_ref = None

    layer = pl.program_id(1)

    # Layer 0 of this batch: load the input rows into the VMEM carry
    # (resident across the whole layer stack).
    @pl.when(layer == 0)
    def _():
        act_ref[...] = x_ref[0].astype(jnp.float32)

    x = act_ref[...]                                   # (L, D) f32
    L, D = x.shape
    xc = x.astype(compute_dtype)

    # ---- fused, lane-dense QKV projection: one (L, D) @ (D, 3D) matmul.
    #      (wq and bq were pre-scaled by 1/sqrt(Dh) in the wrapper.)
    qkv = jnp.dot(xc, wqkv_ref[0],
                  preferred_element_type=jnp.float32) + bqkv_ref[0]   # (L, 3D) f32
    q, k, v = qkv[:, :D], qkv[:, D:2 * D], qkv[:, 2 * D:]

    def split_heads(t):                                # (L, H*Dh) -> (H, L, Dh)
        return jnp.stack([t[:, h * Dh:(h + 1) * Dh] for h in range(H)], axis=0)

    qh = split_heads(q).astype(compute_dtype)
    kh = split_heads(k).astype(compute_dtype)
    vh = split_heads(v).astype(compute_dtype)

    # ---- per-batch attention (no mask needed; scale already folded into q).
    s = jnp.einsum("hld,hmd->hlm", qh, kh,
                   preferred_element_type=jnp.float32)                # (H, L, L)
    s = s - jnp.max(s, axis=-1, keepdims=True)
    e = jnp.exp(s)
    denom = jnp.sum(e, axis=-1, keepdims=True)
    if output_attention:
        p = e / denom                                  # exact: probs are returned
        attn_ref[0] = p.astype(attn_ref.dtype)
    else:
        p = e * pl.reciprocal(denom, approx=True)      # EUP slot, not returned

    ctx = jnp.einsum("hlm,hmd->hld", p.astype(compute_dtype), vh,
                     preferred_element_type=jnp.float32)              # (H, L, Dh)

    # ---- merge heads back onto lanes; ONE (L, D) @ (D, D) output projection.
    ctx_m = jnp.concatenate([ctx[h] for h in range(H)], axis=-1)      # (L, D)
    attn_out = jnp.dot(ctx_m.astype(compute_dtype), wo_ref[0],
                       preferred_element_type=jnp.float32) + bo_ref[0]

    # ---- residual + norm1, FFN, residual + norm2 (all f32 elementwise math).
    h1 = _layernorm(x + attn_out, g1_ref[0], be1_ref[0])
    ff = jnp.dot(h1.astype(compute_dtype), w1_ref[0],
                 preferred_element_type=jnp.float32) + b1_ref[0]
    if activation == "relu":
        ff = jnp.maximum(ff, 0.0)
    else:
        ff = jax.nn.gelu(ff, approximate=True)
    ff = jnp.dot(ff.astype(compute_dtype), w2_ref[0],
                 preferred_element_type=jnp.float32) + b2_ref[0]
    y = _layernorm(h1 + ff, g2_ref[0], be2_ref[0])

    act_ref[...] = y

    # Last layer: fused final StackEncoder LayerNorm, single output store.
    @pl.when(layer == pl.num_programs(1) - 1)
    def _():
        out_ref[0] = _layernorm(y, gf_ref[...], bf_ref[...]).astype(out_ref.dtype)


# ----------------------------- wrappers -------------------------------------

def _layer_spec(arr):
    nd = arr.ndim
    return pl.BlockSpec((1,) + tuple(arr.shape[1:]),
                        lambda b, l, _nd=nd: (l,) + (0,) * (_nd - 1))


def _prepare_stacked_params(layer_params, H, compute_dtype):
    D = layer_params[0]["wq"].shape[0]
    Dh = D // H
    scale = 1.0 / math.sqrt(Dh)

    # Fold 1/sqrt(Dh) into wq/bq; concatenate q|k|v along the output axis so
    # the kernel does a single lane-dense (L, D) @ (D, 3D) matmul.
    wqkv = jnp.stack([jnp.concatenate(
        [p["wq"] * scale, p["wk"], p["wv"]], axis=1)
        for p in layer_params]).astype(compute_dtype)            # (NL, D, 3D)
    bqkv = jnp.stack([jnp.concatenate(
        [p["bq"] * scale, p["bk"], p["bv"]], axis=1)
        for p in layer_params]).astype(jnp.float32)              # (NL, 1, 3D)

    def stk(name, dtype=jnp.float32):
        return jnp.stack([p[name] for p in layer_params]).astype(dtype)

    return (wqkv, bqkv,
            stk("wo", compute_dtype), stk("bo"),
            stk("w1", compute_dtype), stk("b1"),
            stk("w2", compute_dtype), stk("b2"),
            stk("g1"), stk("be1"), stk("g2"), stk("be2"))


def stack_encoder_forward(x, layer_params, final_gamma, final_beta, num_heads,
                          output_attention=True, compute_dtype=jnp.bfloat16,
                          activation="relu"):
    B, L, D = x.shape
    H = num_heads
    assert D % H == 0, "d_model must be divisible by num_heads"
    Dh = D // H
    NL = len(layer_params)

    stacked = _prepare_stacked_params(layer_params, H, compute_dtype)
    inputs = (x,) + stacked + (final_gamma, final_beta)

    in_specs = [pl.BlockSpec((1, L, D), lambda b, l: (b, 0, 0))]
    in_specs += [_layer_spec(a) for a in stacked]
    in_specs += [pl.BlockSpec((1, D), lambda b, l: (0, 0)),
                 pl.BlockSpec((1, D), lambda b, l: (0, 0))]

    if output_attention:
        out_shape = (jax.ShapeDtypeStruct((B, L, D), x.dtype),
                     jax.ShapeDtypeStruct((NL * B, H, L, L), jnp.float32))
        out_specs = (pl.BlockSpec((1, L, D), lambda b, l: (b, 0, 0)),
                     pl.BlockSpec((1, H, L, L),
                                  lambda b, l, _B=B: (l * _B + b, 0, 0, 0)))
    else:
        out_shape = jax.ShapeDtypeStruct((B, L, D), x.dtype)
        out_specs = pl.BlockSpec((1, L, D), lambda b, l: (b, 0, 0))

    # VMEM budget: resident activation carry + x/out blocks + double-buffered
    # per-layer weight blocks (+ attention block), with headroom.
    per_layer = sum(math.prod(a.shape[1:]) * a.dtype.itemsize for a in stacked)
    resident = 3 * L * D * 4
    attn_blk = (2 * H * L * L * 4) if output_attention else 0
    est = 2 * per_layer + resident + attn_blk + (4 << 20)
    vmem_limit = int(min(max(est, 32 << 20), 128 << 20))

    kernel = functools.partial(stack_encoder_kernel, H=H, Dh=Dh,
                               compute_dtype=compute_dtype,
                               output_attention=output_attention,
                               activation=activation)
    result = pl.pallas_call(
        kernel,
        out_shape=out_shape,
        grid=(B, NL),
        in_specs=in_specs,
        out_specs=out_specs,
        scratch_shapes=[pltpu.VMEM((L, D), jnp.float32)],
        compiler_params=pltpu.CompilerParams(
            dimension_semantics=("parallel", "arbitrary"),
            vmem_limit_bytes=vmem_limit),
    )(*inputs)

    if output_attention:
        out, attn_flat = result
        attn_full = attn_flat.reshape(NL, B, H, L, L)
        attns = [attn_full[i] for i in range(NL)]
    else:
        out = result
        attns = []
    return out, attns


# ----------------------------- parameter init -------------------------------

def init_layer_params(key, D, Dff):
    ks = jax.random.split(key, 6)
    f32 = jnp.float32
    return {
        "wq": 0.02 * jax.random.normal(ks[0], (D, D), f32),
        "bq": jnp.zeros((1, D), f32),
        "wk": 0.02 * jax.random.normal(ks[1], (D, D), f32),
        "bk": jnp.zeros((1, D), f32),
        "wv": 0.02 * jax.random.normal(ks[2], (D, D), f32),
        "bv": jnp.zeros((1, D), f32),
        "wo": 0.02 * jax.random.normal(ks[3], (D, D), f32),
        "bo": jnp.zeros((1, D), f32),
        "w1": 0.02 * jax.random.normal(ks[4], (D, Dff), f32),
        "b1": jnp.zeros((1, Dff), f32),
        "w2": 0.02 * jax.random.normal(ks[5], (Dff, D), f32),
        "b2": jnp.zeros((1, D), f32),
        "g1": jnp.ones((1, D), f32),
        "be1": jnp.zeros((1, D), f32),
        "g2": jnp.ones((1, D), f32),
        "be2": jnp.zeros((1, D), f32),
    }


# ----------------------------- pure-JAX reference ---------------------------

def ref_layer(x, p, H):
    B, L, D = x.shape
    Dh = D // H
    q = x @ p["wq"] + p["bq"]
    k = x @ p["wk"] + p["bk"]
    v = x @ p["wv"] + p["bv"]
    qh = q.reshape(B, L, H, Dh)
    kh = k.reshape(B, L, H, Dh)
    vh = v.reshape(B, L, H, Dh)
    s = jnp.einsum("blhd,bmhd->bhlm", qh, kh) / jnp.sqrt(Dh)
    a = jax.nn.softmax(s, axis=-1)
    ctx = jnp.einsum("bhlm,bmhd->blhd", a, vh).reshape(B, L, D)
    attn_out = ctx @ p["wo"] + p["bo"]
    h1 = _layernorm(x + attn_out, p["g1"], p["be1"])
    ff = jax.nn.relu(h1 @ p["w1"] + p["b1"]) @ p["w2"] + p["b2"]
    return _layernorm(h1 + ff, p["g2"], p["be2"]), a


def ref_forward(x, layer_params, g, b, H):
    enc = x
    attns = []
    for p in layer_params:
        enc, a = ref_layer(enc, p, H)
        attns.append(a)
    return _layernorm(enc, g, b), attns


# ----------------------------- main ------------------------------------------

if __name__ == "__main__":
    B, L, D, H, Dff, NUM_LAYERS = 2, 8, 32, 4, 64, 2

    key = jax.random.PRNGKey(0)
    k_in, *k_layers = jax.random.split(key, 1 + NUM_LAYERS)
    x = jax.random.normal(k_in, (B, L, D), jnp.float32)

    layer_params = [init_layer_params(k, D, Dff) for k in k_layers]
    final_gamma = jnp.ones((1, D), jnp.float32)
    final_beta = jnp.zeros((1, D), jnp.float32)

    enc_ref, attns_ref = ref_forward(x, layer_params, final_gamma, final_beta, H)

    # default path: bf16 MXU operands, f32 accumulation / elementwise math.
    enc, attns = stack_encoder_forward(x, layer_params, final_gamma, final_beta,
                                       H, output_attention=True)
    enc = jax.block_until_ready(enc)
    attns = [jax.block_until_ready(a) for a in attns]
    assert jnp.allclose(enc, enc_ref, atol=2e-2, rtol=2e-2), "encoding mismatch (bf16)"
    for a, ar in zip(attns, attns_ref):
        assert jnp.allclose(a, ar, atol=1e-2, rtol=1e-2), "attention mismatch (bf16)"

    # exact-f32 path: tight check against the reference.
    enc32, attns32 = stack_encoder_forward(x, layer_params, final_gamma,
                                           final_beta, H, output_attention=True,
                                           compute_dtype=jnp.float32)
    enc32 = jax.block_until_ready(enc32)
    assert jnp.allclose(enc32, enc_ref, atol=2e-3, rtol=2e-3), "encoding mismatch (f32)"
    for a, ar in zip(attns32, attns_ref):
        assert jnp.allclose(a, ar, atol=2e-3, rtol=2e-3), "attention mismatch (f32)"

    # fast path: no attention writeback, approx-reciprocal softmax.
    enc_na, _ = stack_encoder_forward(x, layer_params, final_gamma, final_beta,
                                      H, output_attention=False)
    enc_na = jax.block_until_ready(enc_na)
    assert jnp.allclose(enc_na, enc, atol=1e-2, rtol=1e-2), "no-attn path mismatch"

    print("KERNEL_OK")
</pallas_src>

<mosaic_0001>
module attributes {stable_mosaic.version = 11 : i64} {
  func.func @stack_encoder_kernel(%arg0: i32, %arg1: i32, %arg2: memref<1x8x32xf32, #tpu.memory_space<vmem>>, %arg3: memref<1x32x96xbf16, #tpu.memory_space<vmem>>, %arg4: memref<1x1x96xf32, #tpu.memory_space<vmem>>, %arg5: memref<1x32x32xbf16, #tpu.memory_space<vmem>>, %arg6: memref<1x1x32xf32, #tpu.memory_space<vmem>>, %arg7: memref<1x32x64xbf16, #tpu.memory_space<vmem>>, %arg8: memref<1x1x64xf32, #tpu.memory_space<vmem>>, %arg9: memref<1x64x32xbf16, #tpu.memory_space<vmem>>, %arg10: memref<1x1x32xf32, #tpu.memory_space<vmem>>, %arg11: memref<1x1x32xf32, #tpu.memory_space<vmem>>, %arg12: memref<1x1x32xf32, #tpu.memory_space<vmem>>, %arg13: memref<1x1x32xf32, #tpu.memory_space<vmem>>, %arg14: memref<1x1x32xf32, #tpu.memory_space<vmem>>, %arg15: memref<1x32xf32, #tpu.memory_space<vmem>>, %arg16: memref<1x32xf32, #tpu.memory_space<vmem>>, %arg17: memref<1x8x32xf32, #tpu.memory_space<vmem>>, %arg18: memref<1x4x8x8xf32, #tpu.memory_space<vmem>>, %arg19: memref<8x32xf32, #tpu.memory_space<vmem>>) attributes {dimension_semantics = [#tpu.dimension_semantics<parallel>, #tpu.dimension_semantics<arbitrary>], iteration_bounds = array<i64: 2, 2>, scalar_prefetch = 0 : i64, scratch_operands = 1 : i64, tpu.core_type = #tpu.core_type<tc>, window_params = [{transform_indices = @transform_0, window_bounds = array<i64: 1, 8, 32>}, {transform_indices = @transform_1, window_bounds = array<i64: 1, 32, 96>}, {transform_indices = @transform_2, window_bounds = array<i64: 1, 1, 96>}, {transform_indices = @transform_3, window_bounds = array<i64: 1, 32, 32>}, {transform_indices = @transform_4, window_bounds = array<i64: 1, 1, 32>}, {transform_indices = @transform_5, window_bounds = array<i64: 1, 32, 64>}, {transform_indices = @transform_6, window_bounds = array<i64: 1, 1, 64>}, {transform_indices = @transform_7, window_bounds = array<i64: 1, 64, 32>}, {transform_indices = @transform_8, window_bounds = array<i64: 1, 1, 32>}, {transform_indices = @transform_9, window_bounds = array<i64: 1, 1, 32>}, {transform_indices = @transform_10, window_bounds = array<i64: 1, 1, 32>}, {transform_indices = @transform_11, window_bounds = array<i64: 1, 1, 32>}, {transform_indices = @transform_12, window_bounds = array<i64: 1, 1, 32>}, {pipeline_mode = #tpu.pipeline_mode<synchronous>, transform_indices = @transform_13, window_bounds = array<i64: 1, 32>}, {pipeline_mode = #tpu.pipeline_mode<synchronous>, transform_indices = @transform_14, window_bounds = array<i64: 1, 32>}, {transform_indices = @transform_15, window_bounds = array<i64: 1, 8, 32>}, {transform_indices = @transform_16, window_bounds = array<i64: 1, 4, 8, 8>}]} {
    %c0_i32 = arith.constant 0 : i32
    %0 = arith.cmpi eq, %arg1, %c0_i32 : i32
    %1 = arith.extui %0 : i1 to i32
    %c0_i32_0 = arith.constant 0 : i32
    %2 = arith.cmpi ne, %1, %c0_i32_0 : i32
    scf.if %2 {
      %c0_63 = arith.constant 0 : index
      %c0_64 = arith.constant 0 : index
      %c0_65 = arith.constant 0 : index
      %153 = vector.load %arg2[%c0_63, %c0_64, %c0_65] : memref<1x8x32xf32, #tpu.memory_space<vmem>>, vector<1x8x32xf32>
      %154 = vector.shape_cast %153 : vector<1x8x32xf32> to vector<8x32xf32>
      %c0_66 = arith.constant 0 : index
      %c0_67 = arith.constant 0 : index
      %155 = vector.load %arg19[%c0_66, %c0_67] : memref<8x32xf32, #tpu.memory_space<vmem>>, vector<8x32xf32>
      tpu.vector_store %arg19[%c0_66, %c0_67], %154 {strides = array<i32>} : memref<8x32xf32, #tpu.memory_space<vmem>>, vector<8x32xf32>,
    } else {
    }
    %c0 = arith.constant 0 : index
    %c0_1 = arith.constant 0 : index
    %3 = vector.load %arg19[%c0, %c0_1] : memref<8x32xf32, #tpu.memory_space<vmem>>, vector<8x32xf32>
    %4 = arith.truncf %3 : vector<8x32xf32> to vector<8x32xbf16>
    %c0_2 = arith.constant 0 : index
    %c0_3 = arith.constant 0 : index
    %c0_4 = arith.constant 0 : index
    %5 = vector.load %arg3[%c0_2, %c0_3, %c0_4] : memref<1x32x96xbf16, #tpu.memory_space<vmem>>, vector<1x32x96xbf16>
    %6 = vector.shape_cast %5 : vector<1x32x96xbf16> to vector<32x96xbf16>
    %cst = arith.constant dense<0.000000e+00> : vector<8x96xf32>
    %7 = tpu.matmul %4, %6, %cst {dimension_numbers = #tpu.dot_dimension_numbers<[1], [0], [0], [1], [0, 0, 1, 1], [], []>} : vector<8x32xbf16>, vector<32x96xbf16>, vector<8x96xf32> -> vector<8x96xf32>
    %c0_5 = arith.constant 0 : index
    %c0_6 = arith.constant 0 : index
    %c0_7 = arith.constant 0 : index
    %8 = vector.load %arg4[%c0_5, %c0_6, %c0_7] : memref<1x1x96xf32, #tpu.memory_space<vmem>>, vector<1x1x96xf32>
    %9 = vector.shape_cast %8 : vector<1x1x96xf32> to vector<1x96xf32>
    %10 = vector.broadcast %9 : vector<1x96xf32> to vector<8x96xf32>
    %11 = arith.addf %7, %10 : vector<8x96xf32>
    %12 = vector.extract_strided_slice %11 {offsets = [0, 0], sizes = [8, 32], strides = [1, 1]} : vector<8x96xf32> to vector<8x32xf32>
    %13 = vector.extract_strided_slice %11 {offsets = [0, 32], sizes = [8, 32], strides = [1, 1]} : vector<8x96xf32> to vector<8x32xf32>
    %14 = vector.extract_strided_slice %11 {offsets = [0, 64], sizes = [8, 32], strides = [1, 1]} : vector<8x96xf32> to vector<8x32xf32>
    %15 = vector.extract_strided_slice %12 {offsets = [0, 0], sizes = [8, 8], strides = [1, 1]} : vector<8x32xf32> to vector<8x8xf32>
    %16 = vector.extract_strided_slice %12 {offsets = [0, 8], sizes = [8, 8], strides = [1, 1]} : vector<8x32xf32> to vector<8x8xf32>
    %17 = vector.extract_strided_slice %12 {offsets = [0, 16], sizes = [8, 8], strides = [1, 1]} : vector<8x32xf32> to vector<8x8xf32>
    %18 = vector.extract_strided_slice %12 {offsets = [0, 24], sizes = [8, 8], strides = [1, 1]} : vector<8x32xf32> to vector<8x8xf32>
    %19 = vector.shape_cast %15 : vector<8x8xf32> to vector<1x8x8xf32>
    %20 = vector.shape_cast %16 : vector<8x8xf32> to vector<1x8x8xf32>
    %21 = vector.shape_cast %17 : vector<8x8xf32> to vector<1x8x8xf32>
    %22 = vector.shape_cast %18 : vector<8x8xf32> to vector<1x8x8xf32>
    %23 = tpu.concatenate %19, %20, %21, %22 in 0 : vector<1x8x8xf32>, vector<1x8x8xf32>, vector<1x8x8xf32>, vector<1x8x8xf32> -> vector<4x8x8xf32>
    %24 = arith.truncf %23 : vector<4x8x8xf32> to vector<4x8x8xbf16>
    %25 = vector.extract_strided_slice %13 {offsets = [0, 0], sizes = [8, 8], strides = [1, 1]} : vector<8x32xf32> to vector<8x8xf32>
    %26 = vector.extract_strided_slice %13 {offsets = [0, 8], sizes = [8, 8], strides = [1, 1]} : vector<8x32xf32> to vector<8x8xf32>
    %27 = vector.extract_strided_slice %13 {offsets = [0, 16], sizes = [8, 8], strides = [1, 1]} : vector<8x32xf32> to vector<8x8xf32>
    %28 = vector.extract_strided_slice %13 {offsets = [0, 24], sizes = [8, 8], strides = [1, 1]} : vector<8x32xf32> to vector<8x8xf32>
    %29 = vector.shape_cast %25 : vector<8x8xf32> to vector<1x8x8xf32>
    %30 = vector.shape_cast %26 : vector<8x8xf32> to vector<1x8x8xf32>
    %31 = vector.shape_cast %27 : vector<8x8xf32> to vector<1x8x8xf32>
    %32 = vector.shape_cast %28 : vector<8x8xf32> to vector<1x8x8xf32>
    %33 = tpu.concatenate %29, %30, %31, %32 in 0 : vector<1x8x8xf32>, vector<1x8x8xf32>, vector<1x8x8xf32>, vector<1x8x8xf32> -> vector<4x8x8xf32>
    %34 = arith.truncf %33 : vector<4x8x8xf32> to vector<4x8x8xbf16>
    %35 = vector.extract_strided_slice %14 {offsets = [0, 0], sizes = [8, 8], strides = [1, 1]} : vector<8x32xf32> to vector<8x8xf32>
    %36 = vector.extract_strided_slice %14 {offsets = [0, 8], sizes = [8, 8], strides = [1, 1]} : vector<8x32xf32> to vector<8x8xf32>
    %37 = vector.extract_strided_slice %14 {offsets = [0, 16], sizes = [8, 8], strides = [1, 1]} : vector<8x32xf32> to vector<8x8xf32>
    %38 = vector.extract_strided_slice %14 {offsets = [0, 24], sizes = [8, 8], strides = [1, 1]} : vector<8x32xf32> to vector<8x8xf32>
    %39 = vector.shape_cast %35 : vector<8x8xf32> to vector<1x8x8xf32>
    %40 = vector.shape_cast %36 : vector<8x8xf32> to vector<1x8x8xf32>
    %41 = vector.shape_cast %37 : vector<8x8xf32> to vector<1x8x8xf32>
    %42 = vector.shape_cast %38 : vector<8x8xf32> to vector<1x8x8xf32>
    %43 = tpu.concatenate %39, %40, %41, %42 in 0 : vector<1x8x8xf32>, vector<1x8x8xf32>, vector<1x8x8xf32>, vector<1x8x8xf32> -> vector<4x8x8xf32>
    %44 = arith.truncf %43 : vector<4x8x8xf32> to vector<4x8x8xbf16>
    "tpu.trace_start"() <{level = 10 : i32, message = "hld,hmd->hlm"}> : () -> ()
    %cst_8 = arith.constant dense<0.000000e+00> : vector<4x8x8xf32>
    %45 = tpu.matmul %24, %34, %cst_8 {dimension_numbers = #tpu.dot_dimension_numbers<[2], [2], [1], [1], [0, 0, 0, 1, 1, 1], [0], [0]>} : vector<4x8x8xbf16>, vector<4x8x8xbf16>, vector<4x8x8xf32> -> vector<4x8x8xf32>
    "tpu.trace_stop"() : () -> ()
    %cst_9 = arith.constant dense<0xFF800000> : vector<4x8xf32>
    %46 = vector.multi_reduction <maximumf>, %45, %cst_9 [2] : vector<4x8x8xf32> to vector<4x8xf32>
    %47 = vector.shape_cast %46 : vector<4x8xf32> to vector<4x8x1xf32>
    %48 = vector.broadcast %47 : vector<4x8x1xf32> to vector<4x8x8xf32>
    %49 = arith.subf %45, %48 : vector<4x8x8xf32>
    %50 = math.exp %49 : vector<4x8x8xf32>
    %cst_10 = arith.constant dense<0.000000e+00> : vector<4x8xf32>
    %51 = vector.multi_reduction <add>, %50, %cst_10 [2] : vector<4x8x8xf32> to vector<4x8xf32>
    %52 = vector.shape_cast %51 : vector<4x8xf32> to vector<4x8x1xf32>
    %53 = vector.broadcast %52 : vector<4x8x1xf32> to vector<4x8x8xf32>
    %54 = arith.divf %50, %53 : vector<4x8x8xf32>
    %c0_11 = arith.constant 0 : index
    %c0_12 = arith.constant 0 : index
    %c0_13 = arith.constant 0 : index
    %c0_14 = arith.constant 0 : index
    %55 = vector.load %arg18[%c0_11, %c0_12, %c0_13, %c0_14] : memref<1x4x8x8xf32, #tpu.memory_space<vmem>>, vector<1x4x8x8xf32>
    %56 = vector.shape_cast %55 : vector<1x4x8x8xf32> to vector<4x8x8xf32>
    %57 = vector.shape_cast %54 : vector<4x8x8xf32> to vector<1x4x8x8xf32>
    tpu.vector_store %arg18[%c0_11, %c0_12, %c0_13, %c0_14], %57 {strides = array<i32>} : memref<1x4x8x8xf32, #tpu.memory_space<vmem>>, vector<1x4x8x8xf32>,
    %58 = arith.truncf %54 : vector<4x8x8xf32> to vector<4x8x8xbf16>
    "tpu.trace_start"() <{level = 10 : i32, message = "hlm,hmd->hld"}> : () -> ()
    %cst_15 = arith.constant dense<0.000000e+00> : vector<4x8x8xf32>
    %59 = tpu.matmul %58, %44, %cst_15 {dimension_numbers = #tpu.dot_dimension_numbers<[2], [1], [1], [2], [0, 0, 0, 1, 1, 2], [0], [0]>} : vector<4x8x8xbf16>, vector<4x8x8xbf16>, vector<4x8x8xf32> -> vector<4x8x8xf32>
    "tpu.trace_stop"() : () -> ()
    %60 = vector.extract_strided_slice %59 {offsets = [0, 0, 0], sizes = [1, 8, 8], strides = [1, 1, 1]} : vector<4x8x8xf32> to vector<1x8x8xf32>
    %61 = vector.shape_cast %60 : vector<1x8x8xf32> to vector<8x8xf32>
    %62 = vector.extract_strided_slice %59 {offsets = [1, 0, 0], sizes = [1, 8, 8], strides = [1, 1, 1]} : vector<4x8x8xf32> to vector<1x8x8xf32>
    %63 = vector.shape_cast %62 : vector<1x8x8xf32> to vector<8x8xf32>
    %64 = vector.extract_strided_slice %59 {offsets = [2, 0, 0], sizes = [1, 8, 8], strides = [1, 1, 1]} : vector<4x8x8xf32> to vector<1x8x8xf32>
    %65 = vector.shape_cast %64 : vector<1x8x8xf32> to vector<8x8xf32>
    %66 = vector.extract_strided_slice %59 {offsets = [3, 0, 0], sizes = [1, 8, 8], strides = [1, 1, 1]} : vector<4x8x8xf32> to vector<1x8x8xf32>
    %67 = vector.shape_cast %66 : vector<1x8x8xf32> to vector<8x8xf32>
    %68 = tpu.concatenate %61, %63, %65, %67 in 1 : vector<8x8xf32>, vector<8x8xf32>, vector<8x8xf32>, vector<8x8xf32> -> vector<8x32xf32>
    %69 = arith.truncf %68 : vector<8x32xf32> to vector<8x32xbf16>
    %c0_16 = arith.constant 0 : index
    %c0_17 = arith.constant 0 : index
    %c0_18 = arith.constant 0 : index
    %70 = vector.load %arg5[%c0_16, %c0_17, %c0_18] : memref<1x32x32xbf16, #tpu.memory_space<vmem>>, vector<1x32x32xbf16>
    %71 = vector.shape_cast %70 : vector<1x32x32xbf16> to vector<32x32xbf16>
    %cst_19 = arith.constant dense<0.000000e+00> : vector<8x32xf32>
    %72 = tpu.matmul %69, %71, %cst_19 {dimension_numbers = #tpu.dot_dimension_numbers<[1], [0], [0], [1], [0, 0, 1, 1], [], []>} : vector<8x32xbf16>, vector<32x32xbf16>, vector<8x32xf32> -> vector<8x32xf32>
    %c0_20 = arith.constant 0 : index
    %c0_21 = arith.constant 0 : index
    %c0_22 = arith.constant 0 : index
    %73 = vector.load %arg6[%c0_20, %c0_21, %c0_22] : memref<1x1x32xf32, #tpu.memory_space<vmem>>, vector<1x1x32xf32>
    %74 = vector.shape_cast %73 : vector<1x1x32xf32> to vector<1x32xf32>
    %75 = vector.broadcast %74 : vector<1x32xf32> to vector<8x32xf32>
    %76 = arith.addf %72, %75 : vector<8x32xf32>
    %77 = arith.addf %3, %76 : vector<8x32xf32>
    %c0_23 = arith.constant 0 : index
    %c0_24 = arith.constant 0 : index
    %c0_25 = arith.constant 0 : index
    %78 = vector.load %arg11[%c0_23, %c0_24, %c0_25] : memref<1x1x32xf32, #tpu.memory_space<vmem>>, vector<1x1x32xf32>
    %79 = vector.shape_cast %78 : vector<1x1x32xf32> to vector<1x32xf32>
    %c0_26 = arith.constant 0 : index
    %c0_27 = arith.constant 0 : index
    %c0_28 = arith.constant 0 : index
    %80 = vector.load %arg12[%c0_26, %c0_27, %c0_28] : memref<1x1x32xf32, #tpu.memory_space<vmem>>, vector<1x1x32xf32>
    %81 = vector.shape_cast %80 : vector<1x1x32xf32> to vector<1x32xf32>
    %cst_29 = arith.constant dense<0.000000e+00> : vector<8xf32>
    %82 = vector.multi_reduction <add>, %77, %cst_29 [1] : vector<8x32xf32> to vector<8xf32>
    %83 = vector.shape_cast %82 : vector<8xf32> to vector<8x1xf32>
    %cst_30 = arith.constant 3.200000e+01 : f32
    %84 = vector.broadcast %cst_30 : f32 to vector<8x1xf32>
    %85 = arith.divf %83, %84 : vector<8x1xf32>
    %86 = vector.broadcast %85 : vector<8x1xf32> to vector<8x32xf32>
    %87 = arith.subf %77, %86 : vector<8x32xf32>
    %88 = arith.mulf %87, %87 : vector<8x32xf32>
    %cst_31 = arith.constant dense<0.000000e+00> : vector<8xf32>
    %89 = vector.multi_reduction <add>, %88, %cst_31 [1] : vector<8x32xf32> to vector<8xf32>
    %90 = vector.shape_cast %89 : vector<8xf32> to vector<8x1xf32>
    %cst_32 = arith.constant 3.200000e+01 : f32
    %91 = vector.broadcast %cst_32 : f32 to vector<8x1xf32>
    %92 = arith.divf %90, %91 : vector<8x1xf32>
    %93 = vector.broadcast %85 : vector<8x1xf32> to vector<8x32xf32>
    %94 = arith.subf %77, %93 : vector<8x32xf32>
    %cst_33 = arith.constant 9.99999974E-6 : f32
    %95 = vector.broadcast %cst_33 : f32 to vector<8x1xf32>
    %96 = arith.addf %92, %95 : vector<8x1xf32>
    %97 = math.rsqrt %96 : vector<8x1xf32>
    %98 = vector.broadcast %97 : vector<8x1xf32> to vector<8x32xf32>
    %99 = arith.mulf %94, %98 : vector<8x32xf32>
    %100 = vector.broadcast %79 : vector<1x32xf32> to vector<8x32xf32>
    %101 = arith.mulf %99, %100 : vector<8x32xf32>
    %102 = vector.broadcast %81 : vector<1x32xf32> to vector<8x32xf32>
    %103 = arith.addf %101, %102 : vector<8x32xf32>
    %104 = arith.truncf %103 : vector<8x32xf32> to vector<8x32xbf16>
    %c0_34 = arith.constant 0 : index
    %c0_35 = arith.constant 0 : index
    %c0_36 = arith.constant 0 : index
    %105 = vector.load %arg7[%c0_34, %c0_35, %c0_36] : memref<1x32x64xbf16, #tpu.memory_space<vmem>>, vector<1x32x64xbf16>
    %106 = vector.shape_cast %105 : vector<1x32x64xbf16> to vector<32x64xbf16>
    %cst_37 = arith.constant dense<0.000000e+00> : vector<8x64xf32>
    %107 = tpu.matmul %104, %106, %cst_37 {dimension_numbers = #tpu.dot_dimension_numbers<[1], [0], [0], [1], [0, 0, 1, 1], [], []>} : vector<8x32xbf16>, vector<32x64xbf16>, vector<8x64xf32> -> vector<8x64xf32>
    %c0_38 = arith.constant 0 : index
    %c0_39 = arith.constant 0 : index
    %c0_40 = arith.constant 0 : index
    %108 = vector.load %arg8[%c0_38, %c0_39, %c0_40] : memref<1x1x64xf32, #tpu.memory_space<vmem>>, vector<1x1x64xf32>
    %109 = vector.shape_cast %108 : vector<1x1x64xf32> to vector<1x64xf32>
    %110 = vector.broadcast %109 : vector<1x64xf32> to vector<8x64xf32>
    %111 = arith.addf %107, %110 : vector<8x64xf32>
    %cst_41 = arith.constant 0.000000e+00 : f32
    %112 = vector.broadcast %cst_41 : f32 to vector<8x64xf32>
    %113 = arith.maximumf %111, %112 : vector<8x64xf32>
    %114 = arith.truncf %113 : vector<8x64xf32> to vector<8x64xbf16>
    %c0_42 = arith.constant 0 : index
    %c0_43 = arith.constant 0 : index
    %c0_44 = arith.constant 0 : index
    %115 = vector.load %arg9[%c0_42, %c0_43, %c0_44] : memref<1x64x32xbf16, #tpu.memory_space<vmem>>, vector<1x64x32xbf16>
    %116 = vector.shape_cast %115 : vector<1x64x32xbf16> to vector<64x32xbf16>
    %cst_45 = arith.constant dense<0.000000e+00> : vector<8x32xf32>
    %117 = tpu.matmul %114, %116, %cst_45 {dimension_numbers = #tpu.dot_dimension_numbers<[1], [0], [0], [1], [0, 0, 1, 1], [], []>} : vector<8x64xbf16>, vector<64x32xbf16>, vector<8x32xf32> -> vector<8x32xf32>
    %c0_46 = arith.constant 0 : index
    %c0_47 = arith.constant 0 : index
    %c0_48 = arith.constant 0 : index
    %118 = vector.load %arg10[%c0_46, %c0_47, %c0_48] : memref<1x1x32xf32, #tpu.memory_space<vmem>>, vector<1x1x32xf32>
    %119 = vector.shape_cast %118 : vector<1x1x32xf32> to vector<1x32xf32>
    %120 = vector.broadcast %119 : vector<1x32xf32> to vector<8x32xf32>
    %121 = arith.addf %117, %120 : vector<8x32xf32>
    %122 = arith.addf %103, %121 : vector<8x32xf32>
    %c0_49 = arith.constant 0 : index
    %c0_50 = arith.constant 0 : index
    %c0_51 = arith.constant 0 : index
    %123 = vector.load %arg13[%c0_49, %c0_50, %c0_51] : memref<1x1x32xf32, #tpu.memory_space<vmem>>, vector<1x1x32xf32>
    %124 = vector.shape_cast %123 : vector<1x1x32xf32> to vector<1x32xf32>
    %c0_52 = arith.constant 0 : index
    %c0_53 = arith.constant 0 : index
    %c0_54 = arith.constant 0 : index
    %125 = vector.load %arg14[%c0_52, %c0_53, %c0_54] : memref<1x1x32xf32, #tpu.memory_space<vmem>>, vector<1x1x32xf32>
    %126 = vector.shape_cast %125 : vector<1x1x32xf32> to vector<1x32xf32>
    %cst_55 = arith.constant dense<0.000000e+00> : vector<8xf32>
    %127 = vector.multi_reduction <add>, %122, %cst_55 [1] : vector<8x32xf32> to vector<8xf32>
    %128 = vector.shape_cast %127 : vector<8xf32> to vector<8x1xf32>
    %cst_56 = arith.constant 3.200000e+01 : f32
    %129 = vector.broadcast %cst_56 : f32 to vector<8x1xf32>
    %130 = arith.divf %128, %129 : vector<8x1xf32>
    %131 = vector.broadcast %130 : vector<8x1xf32> to vector<8x32xf32>
    %132 = arith.subf %122, %131 : vector<8x32xf32>
    %133 = arith.mulf %132, %132 : vector<8x32xf32>
    %cst_57 = arith.constant dense<0.000000e+00> : vector<8xf32>
    %134 = vector.multi_reduction <add>, %133, %cst_57 [1] : vector<8x32xf32> to vector<8xf32>
    %135 = vector.shape_cast %134 : vector<8xf32> to vector<8x1xf32>
    %cst_58 = arith.constant 3.200000e+01 : f32
    %136 = vector.broadcast %cst_58 : f32 to vector<8x1xf32>
    %137 = arith.divf %135, %136 : vector<8x1xf32>
    %138 = vector.broadcast %130 : vector<8x1xf32> to vector<8x32xf32>
    %139 = arith.subf %122, %138 : vector<8x32xf32>
    %cst_59 = arith.constant 9.99999974E-6 : f32
    %140 = vector.broadcast %cst_59 : f32 to vector<8x1xf32>
    %141 = arith.addf %137, %140 : vector<8x1xf32>
    %142 = math.rsqrt %141 : vector<8x1xf32>
    %143 = vector.broadcast %142 : vector<8x1xf32> to vector<8x32xf32>
    %144 = arith.mulf %139, %143 : vector<8x32xf32>
    %145 = vector.broadcast %124 : vector<1x32xf32> to vector<8x32xf32>
    %146 = arith.mulf %144, %145 : vector<8x32xf32>
    %147 = vector.broadcast %126 : vector<1x32xf32> to vector<8x32xf32>
    %148 = arith.addf %146, %147 : vector<8x32xf32>
    %c0_60 = arith.constant 0 : index
    %c0_61 = arith.constant 0 : index
    %149 = vector.load %arg19[%c0_60, %c0_61] : memref<8x32xf32, #tpu.memory_space<vmem>>, vector<8x32xf32>
    tpu.vector_store %arg19[%c0_60, %c0_61], %148 {strides = array<i32>} : memref<8x32xf32, #tpu.memory_space<vmem>>, vector<8x32xf32>,
    %c1_i32 = arith.constant 1 : i32
    %150 = arith.cmpi eq, %arg1, %c1_i32 : i32
    %151 = arith.extui %150 : i1 to i32
    %c0_i32_62 = arith.constant 0 : i32
    %152 = arith.cmpi ne, %151, %c0_i32_62 : i32
    scf.if %152 {
      %c0_63 = arith.constant 0 : index
      %c0_64 = arith.constant 0 : index
      %153 = vector.load %arg15[%c0_63, %c0_64] : memref<1x32xf32, #tpu.memory_space<vmem>>, vector<1x32xf32>
      %c0_65 = arith.constant 0 : index
      %c0_66 = arith.constant 0 : index
      %154 = vector.load %arg16[%c0_65, %c0_66] : memref<1x32xf32, #tpu.memory_space<vmem>>, vector<1x32xf32>
      %cst_67 = arith.constant dense<0.000000e+00> : vector<8xf32>
      %155 = vector.multi_reduction <add>, %148, %cst_67 [1] : vector<8x32xf32> to vector<8xf32>
      %156 = vector.shape_cast %155 : vector<8xf32> to vector<8x1xf32>
      %cst_68 = arith.constant 3.200000e+01 : f32
      %157 = vector.broadcast %cst_68 : f32 to vector<8x1xf32>
      %158 = arith.divf %156, %157 : vector<8x1xf32>
      %159 = vector.broadcast %158 : vector<8x1xf32> to vector<8x32xf32>
      %160 = arith.subf %148, %159 : vector<8x32xf32>
      %161 = arith.mulf %160, %160 : vector<8x32xf32>
      %cst_69 = arith.constant dense<0.000000e+00> : vector<8xf32>
      %162 = vector.multi_reduction <add>, %161, %cst_69 [1] : vector<8x32xf32> to vector<8xf32>
      %163 = vector.shape_cast %162 : vector<8xf32> to vector<8x1xf32>
      %cst_70 = arith.constant 3.200000e+01 : f32
      %164 = vector.broadcast %cst_70 : f32 to vector<8x1xf32>
      %165 = arith.divf %163, %164 : vector<8x1xf32>
      %166 = vector.broadcast %158 : vector<8x1xf32> to vector<8x32xf32>
      %167 = arith.subf %148, %166 : vector<8x32xf32>
      %cst_71 = arith.constant 9.99999974E-6 : f32
      %168 = vector.broadcast %cst_71 : f32 to vector<8x1xf32>
      %169 = arith.addf %165, %168 : vector<8x1xf32>
      %170 = math.rsqrt %169 : vector<8x1xf32>
      %171 = vector.broadcast %170 : vector<8x1xf32> to vector<8x32xf32>
      %172 = arith.mulf %167, %171 : vector<8x32xf32>
      %173 = vector.broadcast %153 : vector<1x32xf32> to vector<8x32xf32>
      %174 = arith.mulf %172, %173 : vector<8x32xf32>
      %175 = vector.broadcast %154 : vector<1x32xf32> to vector<8x32xf32>
      %176 = arith.addf %174, %175 : vector<8x32xf32>
      %c0_72 = arith.constant 0 : index
      %c0_73 = arith.constant 0 : index
      %c0_74 = arith.constant 0 : index
      %177 = vector.load %arg17[%c0_72, %c0_73, %c0_74] : memref<1x8x32xf32, #tpu.memory_space<vmem>>, vector<1x8x32xf32>
      %178 = vector.shape_cast %177 : vector<1x8x32xf32> to vector<8x32xf32>
      %179 = vector.shape_cast %176 : vector<8x32xf32> to vector<1x8x32xf32>
      tpu.vector_store %arg17[%c0_72, %c0_73, %c0_74], %179 {strides = array<i32>} : memref<1x8x32xf32, #tpu.memory_space<vmem>>, vector<1x8x32xf32>,
    } else {
    }
    return
  }
  func.func @transform_0(%arg0: i32, %arg1: i32) -> (i32, i32, i32) {
    %c0_i32 = arith.constant 0 : i32
    %c0_i32_0 = arith.constant 0 : i32
    %c0_i32_1 = arith.constant 0 : i32
    return %arg0, %c0_i32, %c0_i32_0 : i32, i32, i32
  }
  func.func @transform_1(%arg0: i32, %arg1: i32) -> (i32, i32, i32) {
    %c0_i32 = arith.constant 0 : i32
    %c0_i32_0 = arith.constant 0 : i32
    %c0_i32_1 = arith.constant 0 : i32
    return %arg1, %c0_i32, %c0_i32_0 : i32, i32, i32
  }
  func.func @transform_2(%arg0: i32, %arg1: i32) -> (i32, i32, i32) {
    %c0_i32 = arith.constant 0 : i32
    %c0_i32_0 = arith.constant 0 : i32
    %c0_i32_1 = arith.constant 0 : i32
    return %arg1, %c0_i32, %c0_i32_0 : i32, i32, i32
  }
  func.func @transform_3(%arg0: i32, %arg1: i32) -> (i32, i32, i32) {
    %c0_i32 = arith.constant 0 : i32
    %c0_i32_0 = arith.constant 0 : i32
    %c0_i32_1 = arith.constant 0 : i32
    return %arg1, %c0_i32, %c0_i32_0 : i32, i32, i32
  }
  func.func @transform_4(%arg0: i32, %arg1: i32) -> (i32, i32, i32) {
    %c0_i32 = arith.constant 0 : i32
    %c0_i32_0 = arith.constant 0 : i32
    %c0_i32_1 = arith.constant 0 : i32
    return %arg1, %c0_i32, %c0_i32_0 : i32, i32, i32
  }
  func.func @transform_5(%arg0: i32, %arg1: i32) -> (i32, i32, i32) {
    %c0_i32 = arith.constant 0 : i32
    %c0_i32_0 = arith.constant 0 : i32
    %c0_i32_1 = arith.constant 0 : i32
    return %arg1, %c0_i32, %c0_i32_0 : i32, i32, i32
  }
  func.func @transform_6(%arg0: i32, %arg1: i32) -> (i32, i32, i32) {
    %c0_i32 = arith.constant 0 : i32
    %c0_i32_0 = arith.constant 0 : i32
    %c0_i32_1 = arith.constant 0 : i32
    return %arg1, %c0_i32, %c0_i32_0 : i32, i32, i32
  }
  func.func @transform_7(%arg0: i32, %arg1: i32) -> (i32, i32, i32) {
    %c0_i32 = arith.constant 0 : i32
    %c0_i32_0 = arith.constant 0 : i32
    %c0_i32_1 = arith.constant 0 : i32
    return %arg1, %c0_i32, %c0_i32_0 : i32, i32, i32
  }
  func.func @transform_8(%arg0: i32, %arg1: i32) -> (i32, i32, i32) {
    %c0_i32 = arith.constant 0 : i32
    %c0_i32_0 = arith.constant 0 : i32
    %c0_i32_1 = arith.constant 0 : i32
    return %arg1, %c0_i32, %c0_i32_0 : i32, i32, i32
  }
  func.func @transform_9(%arg0: i32, %arg1: i32) -> (i32, i32, i32) {
    %c0_i32 = arith.constant 0 : i32
    %c0_i32_0 = arith.constant 0 : i32
    %c0_i32_1 = arith.constant 0 : i32
    return %arg1, %c0_i32, %c0_i32_0 : i32, i32, i32
  }
  func.func @transform_10(%arg0: i32, %arg1: i32) -> (i32, i32, i32) {
    %c0_i32 = arith.constant 0 : i32
    %c0_i32_0 = arith.constant 0 : i32
    %c0_i32_1 = arith.constant 0 : i32
    return %arg1, %c0_i32, %c0_i32_0 : i32, i32, i32
  }
  func.func @transform_11(%arg0: i32, %arg1: i32) -> (i32, i32, i32) {
    %c0_i32 = arith.constant 0 : i32
    %c0_i32_0 = arith.constant 0 : i32
    %c0_i32_1 = arith.constant 0 : i32
    return %arg1, %c0_i32, %c0_i32_0 : i32, i32, i32
  }
  func.func @transform_12(%arg0: i32, %arg1: i32) -> (i32, i32, i32) {
    %c0_i32 = arith.constant 0 : i32
    %c0_i32_0 = arith.constant 0 : i32
    %c0_i32_1 = arith.constant 0 : i32
    return %arg1, %c0_i32, %c0_i32_0 : i32, i32, i32
  }
  func.func @transform_13(%arg0: i32, %arg1: i32) -> (i32, i32) {
    %c0_i32 = arith.constant 0 : i32
    %c0_i32_0 = arith.constant 0 : i32
    %c0_i32_1 = arith.constant 0 : i32
    return %c0_i32, %c0_i32_0 : i32, i32
  }
  func.func @transform_14(%arg0: i32, %arg1: i32) -> (i32, i32) {
    %c0_i32 = arith.constant 0 : i32
    %c0_i32_0 = arith.constant 0 : i32
    %c0_i32_1 = arith.constant 0 : i32
    return %c0_i32, %c0_i32_0 : i32, i32
  }
  func.func @transform_15(%arg0: i32, %arg1: i32) -> (i32, i32, i32) {
    %c0_i32 = arith.constant 0 : i32
    %c0_i32_0 = arith.constant 0 : i32
    %c0_i32_1 = arith.constant 0 : i32
    return %arg0, %c0_i32, %c0_i32_0 : i32, i32, i32
  }
  func.func @transform_16(%arg0: i32, %arg1: i32) -> (i32, i32, i32, i32) {
    %c2_i32 = arith.constant 2 : i32
    %0 = arith.muli %arg1, %c2_i32 : i32
    %1 = arith.addi %0, %arg0 : i32
    %c0_i32 = arith.constant 0 : i32
    %c0_i32_0 = arith.constant 0 : i32
    %c0_i32_1 = arith.constant 0 : i32
    %c0_i32_2 = arith.constant 0 : i32
    return %1, %c0_i32, %c0_i32_0, %c0_i32_1 : i32, i32, i32, i32
  }
}

</mosaic_0001>

<llo_original>
// kernel: tpu_custom_call.1
$region0: #{tpu_custom_call.1}
  #allocation0 [shape = 'u32[]', space=smem, size = 0x4, offset = 0x4, fixed_abs, tag = 'smem constant byte address 0x4 - core index']
  #allocation1 [shape = 'u32[144,128]{1,0:T(1,128)}', space=vmem, size = 0x12000, scoped, tag = 'internal scratch']
  #allocation2 [shape = 'f32[8,32]{1,0:T(8,128)}', space=vmem, size = 0x1000, scoped, tag = 'scratch operand']
  %s0 = inlined_call_operand.hbm [shape: f32[2,8,32], index: 0, kind: input, shape index: {}]
  %s1 = inlined_call_operand.vmem [shape: bf16[2,32,96], index: 1, kind: input, shape index: {}]
  %s2 = inlined_call_operand.vmem [shape: f32[2,1,96], index: 2, kind: input, shape index: {}]
  %s3 = inlined_call_operand.vmem [shape: bf16[2,32,32], index: 3, kind: input, shape index: {}]
  %s4 = inlined_call_operand.vmem [shape: f32[2,1,32], index: 4, kind: input, shape index: {}]
  %s5 = inlined_call_operand.vmem [shape: bf16[2,32,64], index: 5, kind: input, shape index: {}]
  %s6 = inlined_call_operand.vmem [shape: f32[2,1,64], index: 6, kind: input, shape index: {}]
  %s7 = inlined_call_operand.vmem [shape: bf16[2,64,32], index: 7, kind: input, shape index: {}]
  %s8 = inlined_call_operand.vmem [shape: f32[2,1,32], index: 8, kind: input, shape index: {}]
  %s9 = inlined_call_operand.vmem [shape: f32[2,1,32], index: 9, kind: input, shape index: {}]
  %s10 = inlined_call_operand.vmem [shape: f32[2,1,32], index: 10, kind: input, shape index: {}]
  %s11 = inlined_call_operand.vmem [shape: f32[2,1,32], index: 11, kind: input, shape index: {}]
  %s12 = inlined_call_operand.vmem [shape: f32[2,1,32], index: 12, kind: input, shape index: {}]
  %s13 = inlined_call_operand.vmem [shape: f32[1,32], index: 13, kind: input, shape index: {}]
  %s14 = inlined_call_operand.vmem [shape: f32[1,32], index: 14, kind: input, shape index: {}]
  %s15 = inlined_call_operand.hbm [shape: f32[2,8,32], index: 15, kind: output, shape index: {0}]
  %s16 = inlined_call_operand.hbm [shape: f32[4,4,8,8], index: 16, kind: output, shape index: {1}]
  %17 = xla_tuple %s15, %s16
  %s18 = sld [smem:[#allocation0]]
  $region113: #{tpu_custom_call.1} parent=0
    _
  %s20 = ssub.s32 1, %s18
  %s21 = scalar_select 0, %s20, %s18
  $region1: #{tpu_custom_call.1} parent=0
    #allocation3 [shape = 'u8[8192]{0}', space=vmem, size = 0x2000, scoped, tag = 'input window, operand 0']
    #allocation4 [shape = 's32[2]{0}', space=sflag, size = 0x8, scoped, tag = 'scoped memory for tpu_custom_call.1']
    #allocation5 [shape = 's32[2]{0}', space=sflag, size = 0x8, scoped, tag = 'scoped memory for tpu_custom_call.1']
    #allocation6 [shape = 'u8[8192]{0}', space=vmem, size = 0x2000, scoped, tag = 'output window, operand 0']
    #allocation7 [shape = 'u8[32768]{0}', space=vmem, size = 0x8000, scoped, tag = 'output window, operand 1']
    #allocation8 [shape = 's32[2]{0}', space=sflag, size = 0x8, scoped, tag = 'scoped memory for tpu_custom_call.1']
    %22 = vsyncpa [#allocation4], 0
    %s23 = scalar_lea.sflag [#allocation4], 1
    %24 = vsyncpa %s23, 0
    %25 = vsyncpa [#allocation5], 0
    %s26 = scalar_lea.sflag [#allocation5], 1
    %27 = vsyncpa %s26, 0
    %28 = vsyncpa [#allocation8], 0
    %s29 = scalar_lea.sflag [#allocation8], 1
    %30 = vsyncpa %s29, 0
    loop: start=0, step=1, limit=6
    $region2: #{tpu_custom_call.1} parent=1 // loop_pre_header
      _
    $region3: #{tpu_custom_call.1} parent=1 // loop_header
      %s32 = sphi 0, %s36
      %p33 = scmp.ge.s32.totalorder %s32, 6
      %s39 = sphi 0, %s51
      %s40 = sphi 0, %s47
      %s41 = sphi 0, %s39
      %s42 = sphi 0, %s40
      %s43 = sphi 0, %s41
      %s44 = sphi 0, %s42
      %s54 = sphi 0, %s56
      %s57 = sphi 0, %s54
      %s58 = sphi 0, %s57
      %s74 = sphi 0, %s58
      %s80 = sphi 0, %s82
      %s83 = sphi 0, %s80
      %s84 = sphi 0, %s83
      %s100 = sphi 0, %s84
      %s106 = sphi 0, %s108
      %s109 = sphi 0, %s106
      %s110 = sphi 0, %s109
      %s126 = sphi 0, %s110
      %s132 = sphi 0, %s134
      %s135 = sphi 0, %s132
      %s136 = sphi 0, %s135
      %s152 = sphi 0, %s136
      %s158 = sphi 0, %s160
      %s161 = sphi 0, %s158
      %s162 = sphi 0, %s161
      %s178 = sphi 0, %s162
      %s184 = sphi 0, %s186
      %s187 = sphi 0, %s184
      %s188 = sphi 0, %s187
      %s204 = sphi 0, %s188
      %s210 = sphi 0, %s212
      %s213 = sphi 0, %s210
      %s214 = sphi 0, %s213
      %s230 = sphi 0, %s214
      %s236 = sphi 0, %s238
      %s239 = sphi 0, %s236
      %s240 = sphi 0, %s239
      %s256 = sphi 0, %s240
      %s262 = sphi 0, %s264
      %s265 = sphi 0, %s262
      %s266 = sphi 0, %s265
      %s282 = sphi 0, %s266
      %s288 = sphi 0, %s290
      %s291 = sphi 0, %s288
      %s292 = sphi 0, %s291
      %s308 = sphi 0, %s292
      %s314 = sphi 0, %s316
      %s317 = sphi 0, %s314
      %s318 = sphi 0, %s317
      %s334 = sphi 0, %s318
      %s340 = sphi 0, %s342
      %s343 = sphi 0, %s340
      %s344 = sphi 0, %s343
      %s360 = sphi 0, %s344
      %s366 = sphi 0, %s368
      %s369 = sphi 0, %s366
      %s370 = sphi 0, %s369
      %s386 = sphi 0, %s370
      %s390 = sphi 0, %s390
      %s392 = sphi 0, %s390
      %s393 = sphi 0, %s392
      %s407 = sphi 0, %s393
      %s411 = sphi 0, %s411
      %s413 = sphi 0, %s411
      %s414 = sphi 0, %s413
      %s428 = sphi 0, %s414
      %s434 = sphi 0, %s436
      %s437 = sphi 0, %s434
      %s438 = sphi 0, %s437
      %s454 = sphi 0, %s438
      %s464 = sphi 0, %s466
      %s467 = sphi 0, %s464
      %s468 = sphi 0, %s467
      %s484 = sphi 0, %s468
    $region4: #{tpu_custom_call.1} parent=1 // loop_header_branch
      %35 = sbr.rel (%p33) target = $region8
    $region5: #{tpu_custom_call.1} parent=1 // loop_body
      %s37 = ssub.s32 %s32, 1
      %s38 = ssub.s32 %s32, 2
      %s45 = sadd.s32 1, %s40
      %p46 = scmp.ge.s32.totalorder %s45, 2
      %s47 = scalar_select %p46, 0, %s45
      %s48 = sadd.s32 1, %s39
      %s49 = scalar_select %p46, %s48, %s39
      %p50 = scmp.ge.s32.totalorder %s49, 2
      %s51 = scalar_select %p50, 0, %s49
      %s52 = ssub.s32 %s39, %s51
      %p53 = scmp.eq.s32.totalorder %s52, 0
      %s55 = sadd.s32 %s54, 1
      %s56 = scalar_select %p53, %s54, %s55
      %p59 = pneg %p53
      %p60 = scmp.eq.s32.totalorder %s32, 3
      %p61 = por %p59, %p60
      %p62 = scmp.ne.s32.totalorder %s54, %s57
      %p63 = scmp.eq.s32.totalorder %s32, 0
      %p64 = por %p62, %p63
      %p65 = scmp.ne.s32.totalorder %s54, %s57
      %p66 = scmp.eq.s32.totalorder %s37, 3
      %p67 = por %p65, %p66
      %p68 = scmp.ne.s32.totalorder %s57, %s58
      %p69 = scmp.eq.s32.totalorder %s37, 0
      %p70 = por %p68, %p69
      %p71 = scmp.ne.s32.totalorder %s57, %s58
      %p72 = scmp.eq.s32.totalorder %s38, 3
      %p73 = por %p71, %p72
      %p75 = scmp.ne.s32.totalorder %s58, %s74
      %p76 = scmp.eq.s32.totalorder %s38, 0
      %p77 = por %p75, %p76
      %s78 = ssub.s32 %s40, %s47
      %p79 = scmp.eq.s32.totalorder %s78, 0
      %s81 = sadd.s32 %s80, 1
      %s82 = scalar_select %p79, %s80, %s81
      %p85 = pneg %p79
      %p86 = scmp.eq.s32.totalorder %s32, 3
      %p87 = por %p85, %p86
      %p88 = scmp.ne.s32.totalorder %s80, %s83
      %p89 = scmp.eq.s32.totalorder %s32, 0
      %p90 = por %p88, %p89
      %p91 = scmp.ne.s32.totalorder %s80, %s83
      %p92 = scmp.eq.s32.totalorder %s37, 3
      %p93 = por %p91, %p92
      %p94 = scmp.ne.s32.totalorder %s83, %s84
      %p95 = scmp.eq.s32.totalorder %s37, 0
      %p96 = por %p94, %p95
      %p97 = scmp.ne.s32.totalorder %s83, %s84
      %p98 = scmp.eq.s32.totalorder %s38, 3
      %p99 = por %p97, %p98
      %p101 = scmp.ne.s32.totalorder %s84, %s100
      %p102 = scmp.eq.s32.totalorder %s38, 0
      %p103 = por %p101, %p102
      %s104 = ssub.s32 %s40, %s47
      %p105 = scmp.eq.s32.totalorder %s104, 0
      %s107 = sadd.s32 %s106, 1
      %s108 = scalar_select %p105, %s106, %s107
      %p111 = pneg %p105
      %p112 = scmp.eq.s32.totalorder %s32, 3
      %p113 = por %p111, %p112
      %p114 = scmp.ne.s32.totalorder %s106, %s109
      %p115 = scmp.eq.s32.totalorder %s32, 0
      %p116 = por %p114, %p115
      %p117 = scmp.ne.s32.totalorder %s106, %s109
      %p118 = scmp.eq.s32.totalorder %s37, 3
      %p119 = por %p117, %p118
      %p120 = scmp.ne.s32.totalorder %s109, %s110
      %p121 = scmp.eq.s32.totalorder %s37, 0
      %p122 = por %p120, %p121
      %p123 = scmp.ne.s32.totalorder %s109, %s110
      %p124 = scmp.eq.s32.totalorder %s38, 3
      %p125 = por %p123, %p124
      %p127 = scmp.ne.s32.totalorder %s110, %s126
      %p128 = scmp.eq.s32.totalorder %s38, 0
      %p129 = por %p127, %p128
      %s130 = ssub.s32 %s40, %s47
      %p131 = scmp.eq.s32.totalorder %s130, 0
      %s133 = sadd.s32 %s132, 1
      %s134 = scalar_select %p131, %s132, %s133
      %p137 = pneg %p131
      %p138 = scmp.eq.s32.totalorder %s32, 3
      %p139 = por %p137, %p138
      %p140 = scmp.ne.s32.totalorder %s132, %s135
      %p141 = scmp.eq.s32.totalorder %s32, 0
      %p142 = por %p140, %p141
      %p143 = scmp.ne.s32.totalorder %s132, %s135
      %p144 = scmp.eq.s32.totalorder %s37, 3
      %p145 = por %p143, %p144
      %p146 = scmp.ne.s32.totalorder %s135, %s136
      %p147 = scmp.eq.s32.totalorder %s37, 0
      %p148 = por %p146, %p147
      %p149 = scmp.ne.s32.totalorder %s135, %s136
      %p150 = scmp.eq.s32.totalorder %s38, 3
      %p151 = por %p149, %p150
      %p153 = scmp.ne.s32.totalorder %s136, %s152
      %p154 = scmp.eq.s32.totalorder %s38, 0
      %p155 = por %p153, %p154
      %s156 = ssub.s32 %s40, %s47
      %p157 = scmp.eq.s32.totalorder %s156, 0
      %s159 = sadd.s32 %s158, 1
      %s160 = scalar_select %p157, %s158, %s159
      %p163 = pneg %p157
      %p164 = scmp.eq.s32.totalorder %s32, 3
      %p165 = por %p163, %p164
      %p166 = scmp.ne.s32.totalorder %s158, %s161
      %p167 = scmp.eq.s32.totalorder %s32, 0
      %p168 = por %p166, %p167
      %p169 = scmp.ne.s32.totalorder %s158, %s161
      %p170 = scmp.eq.s32.totalorder %s37, 3
      %p171 = por %p169, %p170
      %p172 = scmp.ne.s32.totalorder %s161, %s162
      %p173 = scmp.eq.s32.totalorder %s37, 0
      %p174 = por %p172, %p173
      %p175 = scmp.ne.s32.totalorder %s161, %s162
      %p176 = scmp.eq.s32.totalorder %s38, 3
      %p177 = por %p175, %p176
      %p179 = scmp.ne.s32.totalorder %s162, %s178
      %p180 = scmp.eq.s32.totalorder %s38, 0
      %p181 = por %p179, %p180
      %s182 = ssub.s32 %s40, %s47
      %p183 = scmp.eq.s32.totalorder %s182, 0
      %s185 = sadd.s32 %s184, 1
      %s186 = scalar_select %p183, %s184, %s185
      %p189 = pneg %p183
      %p190 = scmp.eq.s32.totalorder %s32, 3
      %p191 = por %p189, %p190
      %p192 = scmp.ne.s32.totalorder %s184, %s187
      %p193 = scmp.eq.s32.totalorder %s32, 0
      %p194 = por %p192, %p193
      %p195 = scmp.ne.s32.totalorder %s184, %s187
      %p196 = scmp.eq.s32.totalorder %s37, 3
      %p197 = por %p195, %p196
      %p198 = scmp.ne.s32.totalorder %s187, %s188
      %p199 = scmp.eq.s32.totalorder %s37, 0
      %p200 = por %p198, %p199
      %p201 = scmp.ne.s32.totalorder %s187, %s188
      %p202 = scmp.eq.s32.totalorder %s38, 3
      %p203 = por %p201, %p202
      %p205 = scmp.ne.s32.totalorder %s188, %s204
      %p206 = scmp.eq.s32.totalorder %s38, 0
      %p207 = por %p205, %p206
      %s208 = ssub.s32 %s40, %s47
      %p209 = scmp.eq.s32.totalorder %s208, 0
      %s211 = sadd.s32 %s210, 1
      %s212 = scalar_select %p209, %s210, %s211
      %p215 = pneg %p209
      %p216 = scmp.eq.s32.totalorder %s32, 3
      %p217 = por %p215, %p216
      %p218 = scmp.ne.s32.totalorder %s210, %s213
      %p219 = scmp.eq.s32.totalorder %s32, 0
      %p220 = por %p218, %p219
      %p221 = scmp.ne.s32.totalorder %s210, %s213
      %p222 = scmp.eq.s32.totalorder %s37, 3
      %p223 = por %p221, %p222
      %p224 = scmp.ne.s32.totalorder %s213, %s214
      %p225 = scmp.eq.s32.totalorder %s37, 0
      %p226 = por %p224, %p225
      %p227 = scmp.ne.s32.totalorder %s213, %s214
      %p228 = scmp.eq.s32.totalorder %s38, 3
      %p229 = por %p227, %p228
      %p231 = scmp.ne.s32.totalorder %s214, %s230
      %p232 = scmp.eq.s32.totalorder %s38, 0
      %p233 = por %p231, %p232
      %s234 = ssub.s32 %s40, %s47
      %p235 = scmp.eq.s32.totalorder %s234, 0
      %s237 = sadd.s32 %s236, 1
      %s238 = scalar_select %p235, %s236, %s237
      %p241 = pneg %p235
      %p242 = scmp.eq.s32.totalorder %s32, 3
      %p243 = por %p241, %p242
      %p244 = scmp.ne.s32.totalorder %s236, %s239
      %p245 = scmp.eq.s32.totalorder %s32, 0
      %p246 = por %p244, %p245
      %p247 = scmp.ne.s32.totalorder %s236, %s239
      %p248 = scmp.eq.s32.totalorder %s37, 3
      %p249 = por %p247, %p248
      %p250 = scmp.ne.s32.totalorder %s239, %s240
      %p251 = scmp.eq.s32.totalorder %s37, 0
      %p252 = por %p250, %p251
      %p253 = scmp.ne.s32.totalorder %s239, %s240
      %p254 = scmp.eq.s32.totalorder %s38, 3
      %p255 = por %p253, %p254
      %p257 = scmp.ne.s32.totalorder %s240, %s256
      %p258 = scmp.eq.s32.totalorder %s38, 0
      %p259 = por %p257, %p258
      %s260 = ssub.s32 %s40, %s47
      %p261 = scmp.eq.s32.totalorder %s260, 0
      %s263 = sadd.s32 %s262, 1
      %s264 = scalar_select %p261, %s262, %s263
      %p267 = pneg %p261
      %p268 = scmp.eq.s32.totalorder %s32, 3
      %p269 = por %p267, %p268
      %p270 = scmp.ne.s32.totalorder %s262, %s265
      %p271 = scmp.eq.s32.totalorder %s32, 0
      %p272 = por %p270, %p271
      %p273 = scmp.ne.s32.totalorder %s262, %s265
      %p274 = scmp.eq.s32.totalorder %s37, 3
      %p275 = por %p273, %p274
      %p276 = scmp.ne.s32.totalorder %s265, %s266
      %p277 = scmp.eq.s32.totalorder %s37, 0
      %p278 = por %p276, %p277
      %p279 = scmp.ne.s32.totalorder %s265, %s266
      %p280 = scmp.eq.s32.totalorder %s38, 3
      %p281 = por %p279, %p280
      %p283 = scmp.ne.s32.totalorder %s266, %s282
      %p284 = scmp.eq.s32.totalorder %s38, 0
      %p285 = por %p283, %p284
      %s286 = ssub.s32 %s40, %s47
      %p287 = scmp.eq.s32.totalorder %s286, 0
      %s289 = sadd.s32 %s288, 1
      %s290 = scalar_select %p287, %s288, %s289
      %p293 = pneg %p287
      %p294 = scmp.eq.s32.totalorder %s32, 3
      %p295 = por %p293, %p294
      %p296 = scmp.ne.s32.totalorder %s288, %s291
      %p297 = scmp.eq.s32.totalorder %s32, 0
      %p298 = por %p296, %p297
      %p299 = scmp.ne.s32.totalorder %s288, %s291
      %p300 = scmp.eq.s32.totalorder %s37, 3
      %p301 = por %p299, %p300
      %p302 = scmp.ne.s32.totalorder %s291, %s292
      %p303 = scmp.eq.s32.totalorder %s37, 0
      %p304 = por %p302, %p303
      %p305 = scmp.ne.s32.totalorder %s291, %s292
      %p306 = scmp.eq.s32.totalorder %s38, 3
      %p307 = por %p305, %p306
      %p309 = scmp.ne.s32.totalorder %s292, %s308
      %p310 = scmp.eq.s32.totalorder %s38, 0
      %p311 = por %p309, %p310
      %s312 = ssub.s32 %s40, %s47
      %p313 = scmp.eq.s32.totalorder %s312, 0
      %s315 = sadd.s32 %s314, 1
      %s316 = scalar_select %p313, %s314, %s315
      %p319 = pneg %p313
      %p320 = scmp.eq.s32.totalorder %s32, 3
      %p321 = por %p319, %p320
      %p322 = scmp.ne.s32.totalorder %s314, %s317
      %p323 = scmp.eq.s32.totalorder %s32, 0
      %p324 = por %p322, %p323
      %p325 = scmp.ne.s32.totalorder %s314, %s317
      %p326 = scmp.eq.s32.totalorder %s37, 3
      %p327 = por %p325, %p326
      %p328 = scmp.ne.s32.totalorder %s317, %s318
      %p329 = scmp.eq.s32.totalorder %s37, 0
      %p330 = por %p328, %p329
      %p331 = scmp.ne.s32.totalorder %s317, %s318
      %p332 = scmp.eq.s32.totalorder %s38, 3
      %p333 = por %p331, %p332
      %p335 = scmp.ne.s32.totalorder %s318, %s334
      %p336 = scmp.eq.s32.totalorder %s38, 0
      %p337 = por %p335, %p336
      %s338 = ssub.s32 %s40, %s47
      %p339 = scmp.eq.s32.totalorder %s338, 0
      %s341 = sadd.s32 %s340, 1
      %s342 = scalar_select %p339, %s340, %s341
      %p345 = pneg %p339
      %p346 = scmp.eq.s32.totalorder %s32, 3
      %p347 = por %p345, %p346
      %p348 = scmp.ne.s32.totalorder %s340, %s343
      %p349 = scmp.eq.s32.totalorder %s32, 0
      %p350 = por %p348, %p349
      %p351 = scmp.ne.s32.totalorder %s340, %s343
      %p352 = scmp.eq.s32.totalorder %s37, 3
      %p353 = por %p351, %p352
      %p354 = scmp.ne.s32.totalorder %s343, %s344
      %p355 = scmp.eq.s32.totalorder %s37, 0
      %p356 = por %p354, %p355
      %p357 = scmp.ne.s32.totalorder %s343, %s344
      %p358 = scmp.eq.s32.totalorder %s38, 3
      %p359 = por %p357, %p358
      %p361 = scmp.ne.s32.totalorder %s344, %s360
      %p362 = scmp.eq.s32.totalorder %s38, 0
      %p363 = por %p361, %p362
      %s364 = ssub.s32 %s40, %s47
      %p365 = scmp.eq.s32.totalorder %s364, 0
      %s367 = sadd.s32 %s366, 1
      %s368 = scalar_select %p365, %s366, %s367
      %p371 = pneg %p365
      %p372 = scmp.eq.s32.totalorder %s32, 3
      %p373 = por %p371, %p372
      %p374 = scmp.ne.s32.totalorder %s366, %s369
      %p375 = scmp.eq.s32.totalorder %s32, 0
      %p376 = por %p374, %p375
      %p377 = scmp.ne.s32.totalorder %s366, %s369
      %p378 = scmp.eq.s32.totalorder %s37, 3
      %p379 = por %p377, %p378
      %p380 = scmp.ne.s32.totalorder %s369, %s370
      %p381 = scmp.eq.s32.totalorder %s37, 0
      %p382 = por %p380, %p381
      %p383 = scmp.ne.s32.totalorder %s369, %s370
      %p384 = scmp.eq.s32.totalorder %s38, 3
      %p385 = por %p383, %p384
      %p387 = scmp.ne.s32.totalorder %s370, %s386
      %p388 = scmp.eq.s32.totalorder %s38, 0
      %p389 = por %p387, %p388
      %s391 = sadd.s32 %s390, 1
      %p394 = scmp.eq.s32.totalorder %s32, 3
      %p395 = scmp.ne.s32.totalorder %s390, %s392
      %p396 = scmp.eq.s32.totalorder %s32, 0
      %p397 = por %p395, %p396
      %p398 = scmp.ne.s32.totalorder %s390, %s392
      %p399 = scmp.eq.s32.totalorder %s37, 3
      %p400 = por %p398, %p399
      %p401 = scmp.ne.s32.totalorder %s392, %s393
      %p402 = scmp.eq.s32.totalorder %s37, 0
      %p403 = por %p401, %p402
      %p404 = scmp.ne.s32.totalorder %s392, %s393
      %p405 = scmp.eq.s32.totalorder %s38, 3
      %p406 = por %p404, %p405
      %p408 = scmp.ne.s32.totalorder %s393, %s407
      %p409 = scmp.eq.s32.totalorder %s38, 0
      %p410 = por %p408, %p409
      %s412 = sadd.s32 %s411, 1
      %p415 = scmp.eq.s32.totalorder %s32, 3
      %p416 = scmp.ne.s32.totalorder %s411, %s413
      %p417 = scmp.eq.s32.totalorder %s32, 0
      %p418 = por %p416, %p417
      %p419 = scmp.ne.s32.totalorder %s411, %s413
      %p420 = scmp.eq.s32.totalorder %s37, 3
      %p421 = por %p419, %p420
      %p422 = scmp.ne.s32.totalorder %s413, %s414
      %p423 = scmp.eq.s32.totalorder %s37, 0
      %p424 = por %p422, %p423
      %p425 = scmp.ne.s32.totalorder %s413, %s414
      %p426 = scmp.eq.s32.totalorder %s38, 3
      %p427 = por %p425, %p426
      %p429 = scmp.ne.s32.totalorder %s414, %s428
      %p430 = scmp.eq.s32.totalorder %s38, 0
      %p431 = por %p429, %p430
      %s432 = ssub.s32 %s39, %s51
      %p433 = scmp.eq.s32.totalorder %s432, 0
      %s435 = sadd.s32 %s434, 1
      %s436 = scalar_select %p433, %s434, %s435
      %p439 = pneg %p433
      %p440 = scmp.eq.s32.totalorder %s32, 3
      %p441 = por %p439, %p440
      %p442 = scmp.ne.s32.totalorder %s434, %s437
      %p443 = scmp.eq.s32.totalorder %s32, 0
      %p444 = por %p442, %p443
      %p445 = scmp.ne.s32.totalorder %s434, %s437
      %p446 = scmp.eq.s32.totalorder %s37, 3
      %p447 = por %p445, %p446
      %p448 = scmp.ne.s32.totalorder %s437, %s438
      %p449 = scmp.eq.s32.totalorder %s37, 0
      %p450 = por %p448, %p449
      %p451 = scmp.ne.s32.totalorder %s437, %s438
      %p452 = scmp.eq.s32.totalorder %s38, 3
      %p453 = por %p451, %p452
      %p455 = scmp.ne.s32.totalorder %s438, %s454
      %p456 = scmp.eq.s32.totalorder %s38, 0
      %p457 = por %p455, %p456
      %s458 = smul.u32 %s40, 2
      %s459 = sadd.s32 %s458, %s39
      %s460 = smul.u32 %s47, 2
      %s461 = sadd.s32 %s460, %s51
      %s462 = ssub.s32 %s459, %s461
      %p463 = scmp.eq.s32.totalorder %s462, 0
      %s465 = sadd.s32 %s464, 1
      %s466 = scalar_select %p463, %s464, %s465
      %p469 = pneg %p463
      %p470 = scmp.eq.s32.totalorder %s32, 3
      %p471 = por %p469, %p470
      %p472 = scmp.ne.s32.totalorder %s464, %s467
      %p473 = scmp.eq.s32.totalorder %s32, 0
      %p474 = por %p472, %p473
      %p475 = scmp.ne.s32.totalorder %s464, %s467
      %p476 = scmp.eq.s32.totalorder %s37, 3
      %p477 = por %p475, %p476
      %p478 = scmp.ne.s32.totalorder %s467, %s468
      %p479 = scmp.eq.s32.totalorder %s37, 0
      %p480 = por %p478, %p479
      %p481 = scmp.ne.s32.totalorder %s467, %s468
      %p482 = scmp.eq.s32.totalorder %s38, 3
      %p483 = por %p481, %p482
      %p485 = scmp.ne.s32.totalorder %s468, %s484
      %p486 = scmp.eq.s32.totalorder %s38, 0
      %p487 = por %p485, %p486
      %p488 = scmp.le.s32.totalorder 1, %s32
      %p489 = scmp.lt.s32.totalorder %s32, 5
      %p490 = pnand %p488, %p489
      %p491 = pneg %p490
      // Predicated region
      $region9: #{tpu_custom_call.1} parent=5 // pred_check
        _
      $region10: #{tpu_custom_call.1} parent=5 // pred_check_branch
        %493 = sbr.rel (%p490) target = $region12
      $region11: #{tpu_custom_call.1} parent=5 // pred_region
        %s494 = ssub.s32 %s32, 1
        // Predicated region
        $region13: #{tpu_custom_call.1} parent=11 // pred_check
          %p495 = pneg %p403
        $region14: #{tpu_custom_call.1} parent=11 // pred_check_branch
          %497 = sbr.rel (%p495) target = $region16
        $region15: #{tpu_custom_call.1} parent=11 // pred_region
          _
        $region16: #{tpu_custom_call.1} parent=11 // pred_fallthru
          _
        // Predicated region
        $region17: #{tpu_custom_call.1} parent=11 // pred_check
          %p498 = pneg %p424
        $region18: #{tpu_custom_call.1} parent=11 // pred_check_branch
          %500 = sbr.rel (%p498) target = $region20
        $region19: #{tpu_custom_call.1} parent=11 // pred_region
          _
        $region20: #{tpu_custom_call.1} parent=11 // pred_fallthru
          _
      $region12: #{tpu_custom_call.1} parent=5 // pred_fallthru
        _
      %p501 = scmp.lt.s32.totalorder %s32, 4
      // Predicated region
      $region21: #{tpu_custom_call.1} parent=5 // pred_check
        %p502 = pneg %p501
      $region22: #{tpu_custom_call.1} parent=5 // pred_check_branch
        %504 = sbr.rel (%p502) target = $region24
      $region23: #{tpu_custom_call.1} parent=5 // pred_region
        // Predicated region
        $region25: #{tpu_custom_call.1} parent=23 // pred_check
          %p505 = pneg %p64
        $region26: #{tpu_custom_call.1} parent=23 // pred_check_branch
          %507 = sbr.rel (%p505) target = $region28
        $region27: #{tpu_custom_call.1} parent=23 // pred_region
          %s508 = sand.u32 %s54, 1
          %s509 = scalar_lea.sflag [#allocation4], %s508
          %s510 = sand.u32 %s54, 1
          %s511 = smul.addr %s510, 8
          %s512 = scalar_lea.vmem [#allocation3], %s511
          %s514 = ssub.s32 128, 128
          %515 = vsyncadd %s509, %s514
          %s516 = smul.addr %s39, 128
          %s517 = scalar_lea.hbm %s0, %s516
          %s519 = sshll.u32 %s512, 4
          %s520 = int_to_ptr.vmem [resolvable:$true] %s519
          %522 = dma.hbm_to_vmem [thread:$0]  %s517, 128, %s520, %s509
        $region28: #{tpu_custom_call.1} parent=23 // pred_fallthru
          _
        // Predicated region
        $region29: #{tpu_custom_call.1} parent=23 // pred_check
          %p523 = pneg %p90
        $region30: #{tpu_custom_call.1} parent=23 // pred_check_branch
          %525 = sbr.rel (%p523) target = $region32
        $region31: #{tpu_custom_call.1} parent=23 // pred_region
          %p526 = scmp.lt.s32.totalorder %s40, 1
          %s527 = scalar_select %p526, %s40, 1
          %s528 = smul.addr %s527, 4
          %s529 = smul.addr %s528, 4
          %s530 = scalar_lea.vmem %s1, %s529
        $region32: #{tpu_custom_call.1} parent=23 // pred_fallthru
          _
        // Predicated region
        $region33: #{tpu_custom_call.1} parent=23 // pred_check
          %p531 = pneg %p116
        $region34: #{tpu_custom_call.1} parent=23 // pred_check_branch
          %533 = sbr.rel (%p531) target = $region36
        $region35: #{tpu_custom_call.1} parent=23 // pred_region
          %p534 = scmp.lt.s32.totalorder %s40, 1
          %s535 = scalar_select %p534, %s40, 1
          %s536 = scalar_lea.vmem %s2, %s535
        $region36: #{tpu_custom_call.1} parent=23 // pred_fallthru
          _
        // Predicated region
        $region37: #{tpu_custom_call.1} parent=23 // pred_check
          %p537 = pneg %p142
        $region38: #{tpu_custom_call.1} parent=23 // pred_check_branch
          %539 = sbr.rel (%p537) target = $region40
        $region39: #{tpu_custom_call.1} parent=23 // pred_region
          %p540 = scmp.lt.s32.totalorder %s40, 1
          %s541 = scalar_select %p540, %s40, 1
          %s542 = smul.addr %s541, 4
          %s543 = smul.addr %s542, 4
          %s544 = scalar_lea.vmem %s3, %s543
        $region40: #{tpu_custom_call.1} parent=23 // pred_fallthru
          _
        // Predicated region
        $region41: #{tpu_custom_call.1} parent=23 // pred_check
          %p545 = pneg %p168
        $region42: #{tpu_custom_call.1} parent=23 // pred_check_branch
          %547 = sbr.rel (%p545) target = $region44
        $region43: #{tpu_custom_call.1} parent=23 // pred_region
          %p548 = scmp.lt.s32.totalorder %s40, 1
          %s549 = scalar_select %p548, %s40, 1
          %s550 = scalar_lea.vmem %s4, %s549
        $region44: #{tpu_custom_call.1} parent=23 // pred_fallthru
          _
        // Predicated region
        $region45: #{tpu_custom_call.1} parent=23 // pred_check
          %p551 = pneg %p194
        $region46: #{tpu_custom_call.1} parent=23 // pred_check_branch
          %553 = sbr.rel (%p551) target = $region48
        $region47: #{tpu_custom_call.1} parent=23 // pred_region
          %p554 = scmp.lt.s32.totalorder %s40, 1
          %s555 = scalar_select %p554, %s40, 1
          %s556 = smul.addr %s555, 4
          %s557 = smul.addr %s556, 4
          %s558 = scalar_lea.vmem %s5, %s557
        $region48: #{tpu_custom_call.1} parent=23 // pred_fallthru
          _
        // Predicated region
        $region49: #{tpu_custom_call.1} parent=23 // pred_check
          %p559 = pneg %p220
        $region50: #{tpu_custom_call.1} parent=23 // pred_check_branch
          %561 = sbr.rel (%p559) target = $region52
        $region51: #{tpu_custom_call.1} parent=23 // pred_region
          %p562 = scmp.lt.s32.totalorder %s40, 1
          %s563 = scalar_select %p562, %s40, 1
          %s564 = scalar_lea.vmem %s6, %s563
        $region52: #{tpu_custom_call.1} parent=23 // pred_fallthru
          _
        // Predicated region
        $region53: #{tpu_custom_call.1} parent=23 // pred_check
          %p565 = pneg %p246
        $region54: #{tpu_custom_call.1} parent=23 // pred_check_branch
          %567 = sbr.rel (%p565) target = $region56
        $region55: #{tpu_custom_call.1} parent=23 // pred_region
          %p568 = scmp.lt.s32.totalorder %s40, 1
          %s569 = scalar_select %p568, %s40, 1
          %s570 = smul.addr %s569, 8
          %s571 = smul.addr %s570, 4
          %s572 = scalar_lea.vmem %s7, %s571
        $region56: #{tpu_custom_call.1} parent=23 // pred_fallthru
          _
        // Predicated region
        $region57: #{tpu_custom_call.1} parent=23 // pred_check
          %p573 = pneg %p272
        $region58: #{tpu_custom_call.1} parent=23 // pred_check_branch
          %575 = sbr.rel (%p573) target = $region60
        $region59: #{tpu_custom_call.1} parent=23 // pred_region
          %p576 = scmp.lt.s32.totalorder %s40, 1
          %s577 = scalar_select %p576, %s40, 1
          %s578 = scalar_lea.vmem %s8, %s577
        $region60: #{tpu_custom_call.1} parent=23 // pred_fallthru
          _
        // Predicated region
        $region61: #{tpu_custom_call.1} parent=23 // pred_check
          %p579 = pneg %p298
        $region62: #{tpu_custom_call.1} parent=23 // pred_check_branch
          %581 = sbr.rel (%p579) target = $region64
        $region63: #{tpu_custom_call.1} parent=23 // pred_region
          %p582 = scmp.lt.s32.totalorder %s40, 1
          %s583 = scalar_select %p582, %s40, 1
          %s584 = scalar_lea.vmem %s9, %s583
        $region64: #{tpu_custom_call.1} parent=23 // pred_fallthru
          _
        // Predicated region
        $region65: #{tpu_custom_call.1} parent=23 // pred_check
          %p585 = pneg %p324
        $region66: #{tpu_custom_call.1} parent=23 // pred_check_branch
          %587 = sbr.rel (%p585) target = $region68
        $region67: #{tpu_custom_call.1} parent=23 // pred_region
          %p588 = scmp.lt.s32.totalorder %s40, 1
          %s589 = scalar_select %p588, %s40, 1
          %s590 = scalar_lea.vmem %s10, %s589
        $region68: #{tpu_custom_call.1} parent=23 // pred_fallthru
          _
        // Predicated region
        $region69: #{tpu_custom_call.1} parent=23 // pred_check
          %p591 = pneg %p350
        $region70: #{tpu_custom_call.1} parent=23 // pred_check_branch
          %593 = sbr.rel (%p591) target = $region72
        $region71: #{tpu_custom_call.1} parent=23 // pred_region
          %p594 = scmp.lt.s32.totalorder %s40, 1
          %s595 = scalar_select %p594, %s40, 1
          %s596 = scalar_lea.vmem %s11, %s595
        $region72: #{tpu_custom_call.1} parent=23 // pred_fallthru
          _
        // Predicated region
        $region73: #{tpu_custom_call.1} parent=23 // pred_check
          %p597 = pneg %p376
        $region74: #{tpu_custom_call.1} parent=23 // pred_check_branch
          %599 = sbr.rel (%p597) target = $region76
        $region75: #{tpu_custom_call.1} parent=23 // pred_region
          %p600 = scmp.lt.s32.totalorder %s40, 1
          %s601 = scalar_select %p600, %s40, 1
          %s602 = scalar_lea.vmem %s12, %s601
        $region76: #{tpu_custom_call.1} parent=23 // pred_fallthru
          _
      $region24: #{tpu_custom_call.1} parent=5 // pred_fallthru
        _
      %p603 = scmp.le.s32.totalorder 1, %s32
      %p604 = scmp.lt.s32.totalorder %s32, 5
      %p605 = pnand %p603, %p604
      %p606 = pneg %p605
      // Predicated region
      $region77: #{tpu_custom_call.1} parent=5 // pred_check
        _
      $region78: #{tpu_custom_call.1} parent=5 // pred_check_branch
        %608 = sbr.rel (%p605) target = $region80
      $region79: #{tpu_custom_call.1} parent=5 // pred_region
        %s609 = ssub.s32 %s32, 1
        %s610 = sand.u32 %s57, 1
        %s611 = scalar_lea.sflag [#allocation4], %s610
        %s612 = sand.u32 %s57, 1
        %s613 = smul.addr %s612, 8
        %s614 = scalar_lea.vmem [#allocation3], %s613
        // Predicated region
        $region81: #{tpu_custom_call.1} parent=79 // pred_check
          %p615 = pneg %p70
        $region82: #{tpu_custom_call.1} parent=79 // pred_check_branch
          %617 = sbr.rel (%p615) target = $region84
        $region83: #{tpu_custom_call.1} parent=79 // pred_region
          %618 = dma.done %s611, 128
        $region84: #{tpu_custom_call.1} parent=79 // pred_fallthru
          _
        %s619 = sand.u32 %s57, 1
        %s620 = scalar_lea.sflag [#allocation4], %s619
        %s621 = sand.u32 %s57, 1
        %s622 = smul.addr %s621, 8
        %s623 = scalar_lea.vmem [#allocation3], %s622
        %p624 = pneg %p70
        %p625 = pneg %p67
        %p626 = scmp.lt.s32.totalorder %s42, 1
        %s627 = scalar_select %p626, %s42, 1
        %s628 = smul.addr %s627, 4
        %s629 = smul.addr %s628, 4
        %s630 = scalar_lea.vmem %s1, %s629
        %p631 = pneg %p96
        %p632 = pneg %p93
        %p633 = scmp.lt.s32.totalorder %s42, 1
        %s634 = scalar_select %p633, %s42, 1
        %s635 = scalar_lea.vmem %s2, %s634
        %p636 = pneg %p122
        %p637 = pneg %p119
        %p638 = scmp.lt.s32.totalorder %s42, 1
        %s639 = scalar_select %p638, %s42, 1
        %s640 = smul.addr %s639, 4
        %s641 = smul.addr %s640, 4
        %s642 = scalar_lea.vmem %s3, %s641
        %p643 = pneg %p148
        %p644 = pneg %p145
        %p645 = scmp.lt.s32.totalorder %s42, 1
        %s646 = scalar_select %p645, %s42, 1
        %s647 = scalar_lea.vmem %s4, %s646
        %p648 = pneg %p174
        %p649 = pneg %p171
        %p650 = scmp.lt.s32.totalorder %s42, 1
        %s651 = scalar_select %p650, %s42, 1
        %s652 = smul.addr %s651, 4
        %s653 = smul.addr %s652, 4
        %s654 = scalar_lea.vmem %s5, %s653
        %p655 = pneg %p200
        %p656 = pneg %p197
        %p657 = scmp.lt.s32.totalorder %s42, 1
        %s658 = scalar_select %p657, %s42, 1
        %s659 = scalar_lea.vmem %s6, %s658
        %p660 = pneg %p226
        %p661 = pneg %p223
        %p662 = scmp.lt.s32.totalorder %s42, 1
        %s663 = scalar_select %p662, %s42, 1
        %s664 = smul.addr %s663, 8
        %s665 = smul.addr %s664, 4
        %s666 = scalar_lea.vmem %s7, %s665
        %p667 = pneg %p252
        %p668 = pneg %p249
        %p669 = scmp.lt.s32.totalorder %s42, 1
        %s670 = scalar_select %p669, %s42, 1
        %s671 = scalar_lea.vmem %s8, %s670
        %p672 = pneg %p278
        %p673 = pneg %p275
        %p674 = scmp.lt.s32.totalorder %s42, 1
        %s675 = scalar_select %p674, %s42, 1
        %s676 = scalar_lea.vmem %s9, %s675
        %p677 = pneg %p304
        %p678 = pneg %p301
        %p679 = scmp.lt.s32.totalorder %s42, 1
        %s680 = scalar_select %p679, %s42, 1
        %s681 = scalar_lea.vmem %s10, %s680
        %p682 = pneg %p330
        %p683 = pneg %p327
        %p684 = scmp.lt.s32.totalorder %s42, 1
        %s685 = scalar_select %p684, %s42, 1
        %s686 = scalar_lea.vmem %s11, %s685
        %p687 = pneg %p356
        %p688 = pneg %p353
        %p689 = scmp.lt.s32.totalorder %s42, 1
        %s690 = scalar_select %p689, %s42, 1
        %s691 = scalar_lea.vmem %s12, %s690
        %p692 = pneg %p382
        %p693 = pneg %p379
        %p694 = pneg %p403
        %p695 = pneg %p400
        %p696 = pneg %p424
        %p697 = pneg %p421
        %p698 = pneg %p450
        %p699 = pneg %p447
        %s700 = sand.u32 %s437, 1
        %s701 = scalar_lea.sflag [#allocation5], %s700
        %s702 = sand.u32 %s437, 1
        %s703 = smul.addr %s702, 8
        %s704 = scalar_lea.vmem [#allocation6], %s703
        %p705 = pneg %p480
        %p706 = pneg %p477
        %s707 = sand.u32 %s467, 1
        %s708 = scalar_lea.sflag [#allocation8], %s707
        %s709 = sand.u32 %s467, 1
        %s710 = smul.addr %s709, 32
        %s711 = scalar_lea.vmem [#allocation7], %s710
        %p712 = scmp.lt.s32.totalorder %s42, 1
        %s713 = scalar_select %p712, %s42, 1
        %s714 = smul.addr %s713, 4
        %s715 = smul.addr %s714, 4
        %s716 = scalar_lea.vmem %s1, %s715
        %p717 = scmp.lt.s32.totalorder %s42, 1
        %s718 = scalar_select %p717, %s42, 1
        %s719 = scalar_lea.vmem %s2, %s718
        %p720 = scmp.lt.s32.totalorder %s42, 1
        %s721 = scalar_select %p720, %s42, 1
        %s722 = smul.addr %s721, 4
        %s723 = smul.addr %s722, 4
        %s724 = scalar_lea.vmem %s3, %s723
        %p725 = scmp.lt.s32.totalorder %s42, 1
        %s726 = scalar_select %p725, %s42, 1
        %s727 = scalar_lea.vmem %s4, %s726
        %p728 = scmp.lt.s32.totalorder %s42, 1
        %s729 = scalar_select %p728, %s42, 1
        %s730 = smul.addr %s729, 4
        %s731 = smul.addr %s730, 4
        %s732 = scalar_lea.vmem %s5, %s731
        %p733 = scmp.lt.s32.totalorder %s42, 1
        %s734 = scalar_select %p733, %s42, 1
        %s735 = scalar_lea.vmem %s6, %s734
        %p736 = scmp.lt.s32.totalorder %s42, 1
        %s737 = scalar_select %p736, %s42, 1
        %s738 = smul.addr %s737, 8
        %s739 = smul.addr %s738, 4
        %s740 = scalar_lea.vmem %s7, %s739
        %p741 = scmp.lt.s32.totalorder %s42, 1
        %s742 = scalar_select %p741, %s42, 1
        %s743 = scalar_lea.vmem %s8, %s742
        %p744 = scmp.lt.s32.totalorder %s42, 1
        %s745 = scalar_select %p744, %s42, 1
        %s746 = scalar_lea.vmem %s9, %s745
        %p747 = scmp.lt.s32.totalorder %s42, 1
        %s748 = scalar_select %p747, %s42, 1
        %s749 = scalar_lea.vmem %s10, %s748
        %p750 = scmp.lt.s32.totalorder %s42, 1
        %s751 = scalar_select %p750, %s42, 1
        %s752 = scalar_lea.vmem %s11, %s751
        %p753 = scmp.lt.s32.totalorder %s42, 1
        %s754 = scalar_select %p753, %s42, 1
        %s755 = scalar_lea.vmem %s12, %s754
        %s756 = smul.u32 %s42, 2
        %s757 = sadd.s32 %s756, %s41
        %p759 = scmp.eq.s32.totalorder %s42, 0
        // Predicated region
        $region85: #{tpu_custom_call.1} parent=79 // pred_check
          %p760 = pneg %p759
        $region86: #{tpu_custom_call.1} parent=79 // pred_check_branch
          %762 = sbr.rel (%p760) target = $region88
        $region87: #{tpu_custom_call.1} parent=79 // pred_region
          %v763 = vld [vmem:[%s614] sm:$0xff]
          %vm764 = vcmask 261120
          %765 = vst.msk [vmem:[#allocation2] sm:$0xff] %vm764, %v763
        $region88: #{tpu_custom_call.1} parent=79 // pred_fallthru
          _
        %v766 = vld [vmem:[#allocation2] sm:$0xff]
        %v767 = vpack.c.bf16 %v766, %v766
        %v768 = vld [vmem:[%s716] sm:$0xf]
        %v769 = vld [vmem:[%s716 + $0x4] sm:$0xf]
        %v770 = vld [vmem:[%s716 + $0x8] sm:$0xf]
        %v771 = vld [vmem:[%s716 + $0xc] sm:$0xf]
        %v772 = vld [vmem:[%s719] sm:$0x1]
        %v774 = vlaneseq
        %v775 = vshrl.u32 %v774, 7
        %v776 = vsub.s32 0, %v775
        %v777 = vrot.slane %v772, %v776
        %v783 = vunpack.c.l.b16 %v768
        %v784 = vunpack.c.l.b16 %v769
        %v785 = vunpack.c.l.b16 %v770
        %v786 = vunpack.c.l.b16 %v771
        %v787 = vpack.c.b16 %v784, %v783
        %v788 = vpack.c.b16 %v786, %v785
        %vm791 = vcmask 261120
        %v793 = vsel %vm791, %v767, 0
        %795 = vmatprep.subr.bf16.mxu0 0
        %796 = vmatpush1.bf16.msra.mxu0 %v787
        %797 = vmatprep.subr.bf16.mxu0 0
        %798 = vmatpush1.bf16.msra.mxu0 %v788
        %799 = vmatprep.subr.bf16.mxu0 0
        %800 = vmatpush1.bf16.msra.mxu0 0
        %801 = vmatprep.subr.bf16.mxu0 0
        %802 = vmatpush1.bf16.msra.mxu0 0
        %803 = vmatprep.subr.bf16.mxu0 0
        %804 = vmatpush1.bf16.msra.mxu0 0
        %805 = vmatprep.subr.bf16.mxu0 0
        %806 = vmatpush1.bf16.msra.mxu0 0
        %807 = vmatprep.subr.bf16.mxu0 0
        %808 = vmatpush1.bf16.msra.mxu0 0
        %809 = vmatprep.subr.bf16.mxu0 0
        %810 = vmatpush1.bf16.msra.mxu0 0
        %811 = vmatprep.subr.bf16.mxu0 0
        %812 = vmatpush1.bf16.msra.mxu0 0
        %813 = vmatprep.subr.bf16.mxu0 0
        %814 = vmatpush1.bf16.msra.mxu0 0
        %815 = vmatprep.subr.bf16.mxu0 0
        %816 = vmatpush1.bf16.msra.mxu0 0
        %817 = vmatprep.subr.bf16.mxu0 0
        %818 = vmatpush1.bf16.msra.mxu0 0
        %819 = vmatprep.subr.bf16.mxu0 0
        %820 = vmatpush1.bf16.msra.mxu0 0
        %821 = vmatprep.subr.bf16.mxu0 0
        %822 = vmatpush1.bf16.msra.mxu0 0
        %823 = vmatprep.subr.bf16.mxu0 0
        %824 = vmatpush1.bf16.msra.mxu0 0
        %825 = vmatprep.subr.bf16.mxu0 0
        %826 = vmatpush1.bf16.msra.mxu0 0
        %827 = vmatprep.mubr.bf16.mxu0 0
        %828 = vmatmul.mubr.bf16.gmra.mrb[0].mxu0 %v793
        %v829 = vpop.f32.mrb[0].mxu0
        %v830 = vadd.f32 %v777, %v829
        %v831 = vpop.f32.mrb[0].mxu0
        %v832 = vpop.f32.mrb[0].mxu0
        %v833 = vpop.f32.mrb[0].mxu0
        %834 = vdwg.mxu0
        %836 = vrot.lane.b32.xlu0 %v830, 120
        %v837 = vpop.permute.xlu0 %836
        %839 = vrot.lane.b32.xlu0 %v830, 112
        %v840 = vpop.permute.xlu0 %839
        %842 = vrot.lane.b32.xlu0 %v830, 104
        %v843 = vpop.permute.xlu0 %842
        %v845 = vpack.c.bf16 %v830, %v830
        %v846 = vpack.c.bf16 %v837, %v837
        %v847 = vpack.c.bf16 %v840, %v840
        %v848 = vpack.c.bf16 %v843, %v843
        %850 = vrot.lane.b32.xlu0 %v845, 96
        %v851 = vpop.permute.xlu0 %850
        %vm852 = vcmask 64512
        %v854 = vsel %vm852, %v845, 0
        %v857 = vsel %vm852, %v851, 0
        %859 = vmatprep.subr.bf16.mxu0 0
        %860 = vmatpush1.bf16.xpose.msra.mxu0 %v857
        %861 = vmatprep.subr.bf16.mxu0 0
        %862 = vmatpush1.bf16.xpose.msra.mxu0 0
        %863 = vmatprep.subr.bf16.mxu0 0
        %864 = vmatpush1.bf16.xpose.msra.mxu0 0
        %865 = vmatprep.subr.bf16.mxu0 0
        %866 = vmatpush1.bf16.xpose.msra.mxu0 0
        %867 = vmatprep.subr.bf16.mxu0 0
        %868 = vmatpush1.bf16.xpose.msra.mxu0 0
        %869 = vmatprep.subr.bf16.mxu0 0
        %870 = vmatpush1.bf16.xpose.msra.mxu0 0
        %871 = vmatprep.subr.bf16.mxu0 0
        %872 = vmatpush1.bf16.xpose.msra.mxu0 0
        %873 = vmatprep.subr.bf16.mxu0 0
        %874 = vmatpush1.bf16.xpose.msra.mxu0 0
        %875 = vmatprep.subr.bf16.mxu0 0
        %876 = vmatpush1.bf16.xpose.msra.mxu0 0
        %877 = vmatprep.subr.bf16.mxu0 0
        %878 = vmatpush1.bf16.xpose.msra.mxu0 0
        %879 = vmatprep.subr.bf16.mxu0 0
        %880 = vmatpush1.bf16.xpose.msra.mxu0 0
        %881 = vmatprep.subr.bf16.mxu0 0
        %882 = vmatpush1.bf16.xpose.msra.mxu0 0
        %883 = vmatprep.subr.bf16.mxu0 0
        %884 = vmatpush1.bf16.xpose.msra.mxu0 0
        %885 = vmatprep.subr.bf16.mxu0 0
        %886 = vmatpush1.bf16.xpose.msra.mxu0 0
        %887 = vmatprep.subr.bf16.mxu0 0
        %888 = vmatpush1.bf16.xpose.msra.mxu0 0
        %889 = vmatprep.subr.bf16.mxu0 0
        %890 = vmatpush1.bf16.xpose.msra.mxu0 0
        %891 = vmatprep.mubr.bf16.mxu0 0
        %892 = vmatmul.mubr.bf16.gmra.mrb[0].mxu0 %v854
        %v893 = vpop.f32.mrb[0].mxu0
        %v894 = vadd.f32 0.0, %v893
        %v895 = vpop.f32.mrb[0].mxu0
        %v896 = vpop.f32.mrb[0].mxu0
        %v897 = vpop.f32.mrb[0].mxu0
        %898 = vdwg.mxu0
        %900 = vrot.lane.b32.xlu0 %v846, 96
        %v901 = vpop.permute.xlu0 %900
        %v903 = vsel %vm852, %v846, 0
        %v906 = vsel %vm852, %v901, 0
        %908 = vmatprep.subr.bf16.mxu0 0
        %909 = vmatpush1.bf16.xpose.msra.mxu0 %v906
        %910 = vmatprep.subr.bf16.mxu0 0
        %911 = vmatpush1.bf16.xpose.msra.mxu0 0
        %912 = vmatprep.subr.bf16.mxu0 0
        %913 = vmatpush1.bf16.xpose.msra.mxu0 0
        %914 = vmatprep.subr.bf16.mxu0 0
        %915 = vmatpush1.bf16.xpose.msra.mxu0 0
        %916 = vmatprep.subr.bf16.mxu0 0
        %917 = vmatpush1.bf16.xpose.msra.mxu0 0
        %918 = vmatprep.subr.bf16.mxu0 0
        %919 = vmatpush1.bf16.xpose.msra.mxu0 0
        %920 = vmatprep.subr.bf16.mxu0 0
        %921 = vmatpush1.bf16.xpose.msra.mxu0 0
        %922 = vmatprep.subr.bf16.mxu0 0
        %923 = vmatpush1.bf16.xpose.msra.mxu0 0
        %924 = vmatprep.subr.bf16.mxu0 0
        %925 = vmatpush1.bf16.xpose.msra.mxu0 0
        %926 = vmatprep.subr.bf16.mxu0 0
        %927 = vmatpush1.bf16.xpose.msra.mxu0 0
        %928 = vmatprep.subr.bf16.mxu0 0
        %929 = vmatpush1.bf16.xpose.msra.mxu0 0
        %930 = vmatprep.subr.bf16.mxu0 0
        %931 = vmatpush1.bf16.xpose.msra.mxu0 0
        %932 = vmatprep.subr.bf16.mxu0 0
        %933 = vmatpush1.bf16.xpose.msra.mxu0 0
        %934 = vmatprep.subr.bf16.mxu0 0
        %935 = vmatpush1.bf16.xpose.msra.mxu0 0
        %936 = vmatprep.subr.bf16.mxu0 0
        %937 = vmatpush1.bf16.xpose.msra.mxu0 0
        %938 = vmatprep.subr.bf16.mxu0 0
        %939 = vmatpush1.bf16.xpose.msra.mxu0 0
        %940 = vmatprep.mubr.bf16.mxu0 0
        %941 = vmatmul.mubr.bf16.gmra.mrb[0].mxu0 %v903
        %v942 = vpop.f32.mrb[0].mxu0
        %v943 = vadd.f32 0.0, %v942
        %v944 = vpop.f32.mrb[0].mxu0
        %v945 = vpop.f32.mrb[0].mxu0
        %v946 = vpop.f32.mrb[0].mxu0
        %947 = vdwg.mxu0
        %949 = vrot.lane.b32.xlu0 %v847, 96
        %v950 = vpop.permute.xlu0 %949
        %v952 = vsel %vm852, %v847, 0
        %v955 = vsel %vm852, %v950, 0
        %957 = vmatprep.subr.bf16.mxu0 0
        %958 = vmatpush1.bf16.xpose.msra.mxu0 %v955
        %959 = vmatprep.subr.bf16.mxu0 0
        %960 = vmatpush1.bf16.xpose.msra.mxu0 0
        %961 = vmatprep.subr.bf16.mxu0 0
        %962 = vmatpush1.bf16.xpose.msra.mxu0 0
        %963 = vmatprep.subr.bf16.mxu0 0
        %964 = vmatpush1.bf16.xpose.msra.mxu0 0
        %965 = vmatprep.subr.bf16.mxu0 0
        %966 = vmatpush1.bf16.xpose.msra.mxu0 0
        %967 = vmatprep.subr.bf16.mxu0 0
        %968 = vmatpush1.bf16.xpose.msra.mxu0 0
        %969 = vmatprep.subr.bf16.mxu0 0
        %970 = vmatpush1.bf16.xpose.msra.mxu0 0
        %971 = vmatprep.subr.bf16.mxu0 0
        %972 = vmatpush1.bf16.xpose.msra.mxu0 0
        %973 = vmatprep.subr.bf16.mxu0 0
        %974 = vmatpush1.bf16.xpose.msra.mxu0 0
        %975 = vmatprep.subr.bf16.mxu0 0
        %976 = vmatpush1.bf16.xpose.msra.mxu0 0
        %977 = vmatprep.subr.bf16.mxu0 0
        %978 = vmatpush1.bf16.xpose.msra.mxu0 0
        %979 = vmatprep.subr.bf16.mxu0 0
        %980 = vmatpush1.bf16.xpose.msra.mxu0 0
        %981 = vmatprep.subr.bf16.mxu0 0
        %982 = vmatpush1.bf16.xpose.msra.mxu0 0
        %983 = vmatprep.subr.bf16.mxu0 0
        %984 = vmatpush1.bf16.xpose.msra.mxu0 0
        %985 = vmatprep.subr.bf16.mxu0 0
        %986 = vmatpush1.bf16.xpose.msra.mxu0 0
        %987 = vmatprep.subr.bf16.mxu0 0
        %988 = vmatpush1.bf16.xpose.msra.mxu0 0
        %989 = vmatprep.mubr.bf16.mxu0 0
        %990 = vmatmul.mubr.bf16.gmra.mrb[0].mxu0 %v952
        %v991 = vpop.f32.mrb[0].mxu0
        %v992 = vadd.f32 0.0, %v991
        %v993 = vpop.f32.mrb[0].mxu0
        %v994 = vpop.f32.mrb[0].mxu0
        %v995 = vpop.f32.mrb[0].mxu0
        %996 = vdwg.mxu0
        %998 = vrot.lane.b32.xlu0 %v848, 96
        %v999 = vpop.permute.xlu0 %998
        %v1001 = vsel %vm852, %v848, 0
        %v1004 = vsel %vm852, %v999, 0
        %1006 = vmatprep.subr.bf16.mxu0 0
        %1007 = vmatpush1.bf16.xpose.msra.mxu0 %v1004
        %1008 = vmatprep.subr.bf16.mxu0 0
        %1009 = vmatpush1.bf16.xpose.msra.mxu0 0
        %1010 = vmatprep.subr.bf16.mxu0 0
        %1011 = vmatpush1.bf16.xpose.msra.mxu0 0
        %1012 = vmatprep.subr.bf16.mxu0 0
        %1013 = vmatpush1.bf16.xpose.msra.mxu0 0
        %1014 = vmatprep.subr.bf16.mxu0 0
        %1015 = vmatpush1.bf16.xpose.msra.mxu0 0
        %1016 = vmatprep.subr.bf16.mxu0 0
        %1017 = vmatpush1.bf16.xpose.msra.mxu0 0
        %1018 = vmatprep.subr.bf16.mxu0 0
        %1019 = vmatpush1.bf16.xpose.msra.mxu0 0
        %1020 = vmatprep.subr.bf16.mxu0 0
        %1021 = vmatpush1.bf16.xpose.msra.mxu0 0
        %1022 = vmatprep.subr.bf16.mxu0 0
        %1023 = vmatpush1.bf16.xpose.msra.mxu0 0
        %1024 = vmatprep.subr.bf16.mxu0 0
        %1025 = vmatpush1.bf16.xpose.msra.mxu0 0
        %1026 = vmatprep.subr.bf16.mxu0 0
        %1027 = vmatpush1.bf16.xpose.msra.mxu0 0
        %1028 = vmatprep.subr.bf16.mxu0 0
        %1029 = vmatpush1.bf16.xpose.msra.mxu0 0
        %1030 = vmatprep.subr.bf16.mxu0 0
        %1031 = vmatpush1.bf16.xpose.msra.mxu0 0
        %1032 = vmatprep.subr.bf16.mxu0 0
        %1033 = vmatpush1.bf16.xpose.msra.mxu0 0
        %1034 = vmatprep.subr.bf16.mxu0 0
        %1035 = vmatpush1.bf16.xpose.msra.mxu0 0
        %1036 = vmatprep.subr.bf16.mxu0 0
        %1037 = vmatpush1.bf16.xpose.msra.mxu0 0
        %1038 = vmatprep.mubr.bf16.mxu0 0
        %1039 = vmatmul.mubr.bf16.gmra.mrb[0].mxu0 %v1001
        %v1040 = vpop.f32.mrb[0].mxu0
        %v1041 = vadd.f32 0.0, %v1040
        %v1042 = vpop.f32.mrb[0].mxu0
        %v1043 = vpop.f32.mrb[0].mxu0
        %v1044 = vpop.f32.mrb[0].mxu0
        %1045 = vdwg.mxu0
        %v1046 = vsel %vm852, %v894, -inf
        %1047 = vmax.xlane.f32.xlu0 %v1046
        %v1048 = vpop.xlane.xlu0 %1047
        %v1049 = vsel %vm852, %v943, -inf
        %1050 = vmax.xlane.f32.xlu0 %v1049
        %v1051 = vpop.xlane.xlu0 %1050
        %v1052 = vsel %vm852, %v992, -inf
        %1053 = vmax.xlane.f32.xlu0 %v1052
        %v1054 = vpop.xlane.xlu0 %1053
        %v1055 = vsel %vm852, %v1041, -inf
        %1056 = vmax.xlane.f32.xlu0 %v1055
        %v1057 = vpop.xlane.xlu0 %1056
        %v1058 = vsub.f32 %v894, %v1048
        %v1059 = vsub.f32 %v943, %v1051
        %v1060 = vsub.f32 %v992, %v1054
        %v1061 = vsub.f32 %v1041, %v1057
        %v1062 = vmul.f32 %v1058, 1.442695
        %v1063 = vpow.pop %v1062
        %v1064 = vmul.f32 %v1059, 1.442695
        %v1065 = vpow.pop %v1064
        %v1066 = vmul.f32 %v1060, 1.442695
        %v1067 = vpow.pop %v1066
        %v1068 = vmul.f32 %v1061, 1.442695
        %v1069 = vpow.pop %v1068
        %v1070 = vsel %vm852, %v1063, 0.0
        %1071 = vadd.xlane.f32.xlu0 %v1070
        %v1072 = vpop.xlane.xlu0 %1071
        %v1073 = vsel %vm852, %v1065, 0.0
        %1074 = vadd.xlane.f32.xlu0 %v1073
        %v1075 = vpop.xlane.xlu0 %1074
        %v1076 = vsel %vm852, %v1067, 0.0
        %1077 = vadd.xlane.f32.xlu0 %v1076
        %v1078 = vpop.xlane.xlu0 %1077
        %v1079 = vsel %vm852, %v1069, 0.0
        %1080 = vadd.xlane.f32.xlu0 %v1079
        %v1081 = vpop.xlane.xlu0 %1080
        %v1082 = vrcp.pop %v1072
        %v1083 = vmul.f32 %v1063, %v1082
        %v1084 = vrcp.pop %v1075
        %v1085 = vmul.f32 %v1065, %v1084
        %v1086 = vrcp.pop %v1078
        %v1087 = vmul.f32 %v1067, %v1086
        %v1088 = vrcp.pop %v1081
        %v1089 = vmul.f32 %v1069, %v1088
        %1090 = vst.msk [vmem:[%s711] sm:$0xff] %vm852, %v1083
        %1091 = vst.msk [vmem:[%s711 + $0x8] sm:$0xff] %vm852, %v1085
        %1092 = vst.msk [vmem:[%s711 + $0x10] sm:$0xff] %vm852, %v1087
        %1093 = vst.msk [vmem:[%s711 + $0x18] sm:$0xff] %vm852, %v1089
        %v1094 = vpack.c.bf16 %v1083, %v1083
        %v1095 = vpack.c.bf16 %v1085, %v1085
        %v1096 = vpack.c.bf16 %v1087, %v1087
        %v1097 = vpack.c.bf16 %v1089, %v1089
        %1098 = vrot.lane.b32.xlu0 %v845, 64
        %v1099 = vpop.permute.xlu0 %1098
        %v1101 = vsel %vm852, %v1094, 0
        %vm1103 = vcmask 1043456
        %v1105 = vsel %vm1103, %v1099, 0
        %1107 = vmatprep.subr.bf16.mxu0 0
        %1108 = vmatpush1.bf16.msra.mxu0 %v1105
        %1109 = vmatprep.subr.bf16.mxu0 0
        %1110 = vmatpush1.bf16.msra.mxu0 0
        %1111 = vmatprep.subr.bf16.mxu0 0
        %1112 = vmatpush1.bf16.msra.mxu0 0
        %1113 = vmatprep.subr.bf16.mxu0 0
        %1114 = vmatpush1.bf16.msra.mxu0 0
        %1115 = vmatprep.subr.bf16.mxu0 0
        %1116 = vmatpush1.bf16.msra.mxu0 0
        %1117 = vmatprep.subr.bf16.mxu0 0
        %1118 = vmatpush1.bf16.msra.mxu0 0
        %1119 = vmatprep.subr.bf16.mxu0 0
        %1120 = vmatpush1.bf16.msra.mxu0 0
        %1121 = vmatprep.subr.bf16.mxu0 0
        %1122 = vmatpush1.bf16.msra.mxu0 0
        %1123 = vmatprep.subr.bf16.mxu0 0
        %1124 = vmatpush1.bf16.msra.mxu0 0
        %1125 = vmatprep.subr.bf16.mxu0 0
        %1126 = vmatpush1.bf16.msra.mxu0 0
        %1127 = vmatprep.subr.bf16.mxu0 0
        %1128 = vmatpush1.bf16.msra.mxu0 0
        %1129 = vmatprep.subr.bf16.mxu0 0
        %1130 = vmatpush1.bf16.msra.mxu0 0
        %1131 = vmatprep.subr.bf16.mxu0 0
        %1132 = vmatpush1.bf16.msra.mxu0 0
        %1133 = vmatprep.subr.bf16.mxu0 0
        %1134 = vmatpush1.bf16.msra.mxu0 0
        %1135 = vmatprep.subr.bf16.mxu0 0
        %1136 = vmatpush1.bf16.msra.mxu0 0
        %1137 = vmatprep.subr.bf16.mxu0 0
        %1138 = vmatpush1.bf16.msra.mxu0 0
        %1139 = vmatprep.mubr.bf16.mxu0 0
        %1140 = vmatmul.mubr.bf16.gmra.mrb[0].mxu0 %v1101
        %v1141 = vpop.f32.mrb[0].mxu0
        %v1142 = vadd.f32 0.0, %v1141
        %v1143 = vpop.f32.mrb[0].mxu0
        %v1144 = vpop.f32.mrb[0].mxu0
        %v1145 = vpop.f32.mrb[0].mxu0
        %1146 = vdwg.mxu0
        %1147 = vrot.lane.b32.xlu0 %v846, 64
        %v1148 = vpop.permute.xlu0 %1147
        %v1150 = vsel %vm852, %v1095, 0
        %v1153 = vsel %vm1103, %v1148, 0
        %1155 = vmatprep.subr.bf16.mxu0 0
        %1156 = vmatpush1.bf16.msra.mxu0 %v1153
        %1157 = vmatprep.subr.bf16.mxu0 0
        %1158 = vmatpush1.bf16.msra.mxu0 0
        %1159 = vmatprep.subr.bf16.mxu0 0
        %1160 = vmatpush1.bf16.msra.mxu0 0
        %1161 = vmatprep.subr.bf16.mxu0 0
        %1162 = vmatpush1.bf16.msra.mxu0 0
        %1163 = vmatprep.subr.bf16.mxu0 0
        %1164 = vmatpush1.bf16.msra.mxu0 0
        %1165 = vmatprep.subr.bf16.mxu0 0
        %1166 = vmatpush1.bf16.msra.mxu0 0
        %1167 = vmatprep.subr.bf16.mxu0 0
        %1168 = vmatpush1.bf16.msra.mxu0 0
        %1169 = vmatprep.subr.bf16.mxu0 0
        %1170 = vmatpush1.bf16.msra.mxu0 0
        %1171 = vmatprep.subr.bf16.mxu0 0
        %1172 = vmatpush1.bf16.msra.mxu0 0
        %1173 = vmatprep.subr.bf16.mxu0 0
        %1174 = vmatpush1.bf16.msra.mxu0 0
        %1175 = vmatprep.subr.bf16.mxu0 0
        %1176 = vmatpush1.bf16.msra.mxu0 0
        %1177 = vmatprep.subr.bf16.mxu0 0
        %1178 = vmatpush1.bf16.msra.mxu0 0
        %1179 = vmatprep.subr.bf16.mxu0 0
        %1180 = vmatpush1.bf16.msra.mxu0 0
        %1181 = vmatprep.subr.bf16.mxu0 0
        %1182 = vmatpush1.bf16.msra.mxu0 0
        %1183 = vmatprep.subr.bf16.mxu0 0
        %1184 = vmatpush1.bf16.msra.mxu0 0
        %1185 = vmatprep.subr.bf16.mxu0 0
        %1186 = vmatpush1.bf16.msra.mxu0 0
        %1187 = vmatprep.mubr.bf16.mxu0 0
        %1188 = vmatmul.mubr.bf16.gmra.mrb[0].mxu0 %v1150
        %v1189 = vpop.f32.mrb[0].mxu0
        %v1190 = vadd.f32 0.0, %v1189
        %v1191 = vpop.f32.mrb[0].mxu0
        %v1192 = vpop.f32.mrb[0].mxu0
        %v1193 = vpop.f32.mrb[0].mxu0
        %1194 = vdwg.mxu0
        %1195 = vrot.lane.b32.xlu0 %v847, 64
        %v1196 = vpop.permute.xlu0 %1195
        %v1198 = vsel %vm852, %v1096, 0
        %v1201 = vsel %vm1103, %v1196, 0
        %1203 = vmatprep.subr.bf16.mxu0 0
        %1204 = vmatpush1.bf16.msra.mxu0 %v1201
        %1205 = vmatprep.subr.bf16.mxu0 0
        %1206 = vmatpush1.bf16.msra.mxu0 0
        %1207 = vmatprep.subr.bf16.mxu0 0
        %1208 = vmatpush1.bf16.msra.mxu0 0
        %1209 = vmatprep.subr.bf16.mxu0 0
        %1210 = vmatpush1.bf16.msra.mxu0 0
        %1211 = vmatprep.subr.bf16.mxu0 0
        %1212 = vmatpush1.bf16.msra.mxu0 0
        %1213 = vmatprep.subr.bf16.mxu0 0
        %1214 = vmatpush1.bf16.msra.mxu0 0
        %1215 = vmatprep.subr.bf16.mxu0 0
        %1216 = vmatpush1.bf16.msra.mxu0 0
        %1217 = vmatprep.subr.bf16.mxu0 0
        %1218 = vmatpush1.bf16.msra.mxu0 0
        %1219 = vmatprep.subr.bf16.mxu0 0
        %1220 = vmatpush1.bf16.msra.mxu0 0
        %1221 = vmatprep.subr.bf16.mxu0 0
        %1222 = vmatpush1.bf16.msra.mxu0 0
        %1223 = vmatprep.subr.bf16.mxu0 0
        %1224 = vmatpush1.bf16.msra.mxu0 0
        %1225 = vmatprep.subr.bf16.mxu0 0
        %1226 = vmatpush1.bf16.msra.mxu0 0
        %1227 = vmatprep.subr.bf16.mxu0 0
        %1228 = vmatpush1.bf16.msra.mxu0 0
        %1229 = vmatprep.subr.bf16.mxu0 0
        %1230 = vmatpush1.bf16.msra.mxu0 0
        %1231 = vmatprep.subr.bf16.mxu0 0
        %1232 = vmatpush1.bf16.msra.mxu0 0
        %1233 = vmatprep.subr.bf16.mxu0 0
        %1234 = vmatpush1.bf16.msra.mxu0 0
        %1235 = vmatprep.mubr.bf16.mxu0 0
        %1236 = vmatmul.mubr.bf16.gmra.mrb[0].mxu0 %v1198
        %v1237 = vpop.f32.mrb[0].mxu0
        %v1238 = vadd.f32 0.0, %v1237
        %v1239 = vpop.f32.mrb[0].mxu0
        %v1240 = vpop.f32.mrb[0].mxu0
        %v1241 = vpop.f32.mrb[0].mxu0
        %1242 = vdwg.mxu0
        %1243 = vrot.lane.b32.xlu0 %v848, 64
        %v1244 = vpop.permute.xlu0 %1243
        %v1246 = vsel %vm852, %v1097, 0
        %v1249 = vsel %vm1103, %v1244, 0
        %1251 = vmatprep.subr.bf16.mxu0 0
        %1252 = vmatpush1.bf16.msra.mxu0 %v1249
        %1253 = vmatprep.subr.bf16.mxu0 0
        %1254 = vmatpush1.bf16.msra.mxu0 0
        %1255 = vmatprep.subr.bf16.mxu0 0
        %1256 = vmatpush1.bf16.msra.mxu0 0
        %1257 = vmatprep.subr.bf16.mxu0 0
        %1258 = vmatpush1.bf16.msra.mxu0 0
        %1259 = vmatprep.subr.bf16.mxu0 0
        %1260 = vmatpush1.bf16.msra.mxu0 0
        %1261 = vmatprep.subr.bf16.mxu0 0
        %1262 = vmatpush1.bf16.msra.mxu0 0
        %1263 = vmatprep.subr.bf16.mxu0 0
        %1264 = vmatpush1.bf16.msra.mxu0 0
        %1265 = vmatprep.subr.bf16.mxu0 0
        %1266 = vmatpush1.bf16.msra.mxu0 0
        %1267 = vmatprep.subr.bf16.mxu0 0
        %1268 = vmatpush1.bf16.msra.mxu0 0
        %1269 = vmatprep.subr.bf16.mxu0 0
        %1270 = vmatpush1.bf16.msra.mxu0 0
        %1271 = vmatprep.subr.bf16.mxu0 0
        %1272 = vmatpush1.bf16.msra.mxu0 0
        %1273 = vmatprep.subr.bf16.mxu0 0
        %1274 = vmatpush1.bf16.msra.mxu0 0
        %1275 = vmatprep.subr.bf16.mxu0 0
        %1276 = vmatpush1.bf16.msra.mxu0 0
        %1277 = vmatprep.subr.bf16.mxu0 0
        %1278 = vmatpush1.bf16.msra.mxu0 0
        %1279 = vmatprep.subr.bf16.mxu0 0
        %1280 = vmatpush1.bf16.msra.mxu0 0
        %1281 = vmatprep.subr.bf16.mxu0 0
        %1282 = vmatpush1.bf16.msra.mxu0 0
        %1283 = vmatprep.mubr.bf16.mxu0 0
        %1284 = vmatmul.mubr.bf16.gmra.mrb[0].mxu0 %v1246
        %v1285 = vpop.f32.mrb[0].mxu0
        %v1286 = vadd.f32 0.0, %v1285
        %v1287 = vpop.f32.mrb[0].mxu0
        %v1288 = vpop.f32.mrb[0].mxu0
        %v1289 = vpop.f32.mrb[0].mxu0
        %1290 = vdwg.mxu0
        %1292 = vrot.lane.b32.xlu0 %v1190, 8
        %v1293 = vpop.permute.xlu0 %1292
        %1296 = vrot.lane.b32.xlu0 %v1238, 16
        %v1297 = vpop.permute.xlu0 %1296
        %1300 = vrot.lane.b32.xlu0 %v1286, 24
        %v1301 = vpop.permute.xlu0 %1300
        %v1303 = vsel %vm852, %v1142, %v1293
        %vm1304 = vcmask 130048
        %v1305 = vsel %vm1304, %v1303, %v1297
        %vm1306 = vcmask 195584
        %v1307 = vsel %vm1306, %v1305, %v1301
        %v1308 = vpack.c.bf16 %v1307, %v1307
        %v1309 = vld [vmem:[%s724] sm:$0xf]
        %v1310 = vld [vmem:[%s724 + $0x4] sm:$0xf]
        %v1311 = vld [vmem:[%s724 + $0x8] sm:$0xf]
        %v1312 = vld [vmem:[%s724 + $0xc] sm:$0xf]
        %v1313 = vld [vmem:[%s727] sm:$0x1]
        %v1315 = vlaneseq
        %v1316 = vshrl.u32 %v1315, 7
        %v1317 = vsub.s32 0, %v1316
        %v1318 = vrot.slane %v1313, %v1317
        %v1324 = vunpack.c.l.b16 %v1309
        %v1325 = vunpack.c.l.b16 %v1310
        %v1326 = vunpack.c.l.b16 %v1311
        %v1327 = vunpack.c.l.b16 %v1312
        %v1328 = vpack.c.b16 %v1325, %v1324
        %v1329 = vpack.c.b16 %v1327, %v1326
        %v1333 = vsel %vm791, %v1308, 0
        %1335 = vmatprep.subr.bf16.mxu0 0
        %1336 = vmatpush1.bf16.msra.mxu0 %v1328
        %1337 = vmatprep.subr.bf16.mxu0 0
        %1338 = vmatpush1.bf16.msra.mxu0 %v1329
        %1339 = vmatprep.subr.bf16.mxu0 0
        %1340 = vmatpush1.bf16.msra.mxu0 0
        %1341 = vmatprep.subr.bf16.mxu0 0
        %1342 = vmatpush1.bf16.msra.mxu0 0
        %1343 = vmatprep.subr.bf16.mxu0 0
        %1344 = vmatpush1.bf16.msra.mxu0 0
        %1345 = vmatprep.subr.bf16.mxu0 0
        %1346 = vmatpush1.bf16.msra.mxu0 0
        %1347 = vmatprep.subr.bf16.mxu0 0
        %1348 = vmatpush1.bf16.msra.mxu0 0
        %1349 = vmatprep.subr.bf16.mxu0 0
        %1350 = vmatpush1.bf16.msra.mxu0 0
        %1351 = vmatprep.subr.bf16.mxu0 0
        %1352 = vmatpush1.bf16.msra.mxu0 0
        %1353 = vmatprep.subr.bf16.mxu0 0
        %1354 = vmatpush1.bf16.msra.mxu0 0
        %1355 = vmatprep.subr.bf16.mxu0 0
        %1356 = vmatpush1.bf16.msra.mxu0 0
        %1357 = vmatprep.subr.bf16.mxu0 0
        %1358 = vmatpush1.bf16.msra.mxu0 0
        %1359 = vmatprep.subr.bf16.mxu0 0
        %1360 = vmatpush1.bf16.msra.mxu0 0
        %1361 = vmatprep.subr.bf16.mxu0 0
        %1362 = vmatpush1.bf16.msra.mxu0 0
        %1363 = vmatprep.subr.bf16.mxu0 0
        %1364 = vmatpush1.bf16.msra.mxu0 0
        %1365 = vmatprep.subr.bf16.mxu0 0
        %1366 = vmatpush1.bf16.msra.mxu0 0
        %1367 = vmatprep.mubr.bf16.mxu0 0
        %1368 = vmatmul.mubr.bf16.gmra.mrb[0].mxu0 %v1333
        %v1369 = vpop.f32.mrb[0].mxu0
        %v1370 = vadd.f32 %v1318, %v1369
        %v1371 = vpop.f32.mrb[0].mxu0
        %v1372 = vpop.f32.mrb[0].mxu0
        %v1373 = vpop.f32.mrb[0].mxu0
        %1374 = vdwg.mxu0
        %v1375 = vadd.f32 %v766, %v1370
        %v1376 = vld [vmem:[%s746] sm:$0x1]
        %v1377 = vld [vmem:[%s749] sm:$0x1]
        %v1378 = vsel %vm791, %v1375, 0.0
        %1379 = vadd.xlane.f32.xlu0 %v1378
        %v1380 = vpop.xlane.xlu0 %1379
        %v1381 = vrcp.pop 32.0
        %v1382 = vmul.f32 %v1380, %v1381
        %v1383 = vsub.f32 %v1375, %v1382
        %v1384 = vmul.f32 %v1383, %v1383
        %v1385 = vsel %vm791, %v1384, 0.0
        %1386 = vadd.xlane.f32.xlu0 %v1385
        %v1387 = vpop.xlane.xlu0 %1386
        %v1388 = vmul.f32 %v1387, %v1381
        %v1389 = vadd.f32 %v1388, 1e-05
        %v1390 = vrsqrt.pop %v1389
        %v1391 = vmul.f32 %v1383, %v1390
        %v1393 = vlaneseq
        %v1394 = vshrl.u32 %v1393, 7
        %v1395 = vsub.s32 0, %v1394
        %v1396 = vrot.slane %v1376, %v1395
        %v1398 = vmul.f32 %v1391, %v1396
        %v1400 = vlaneseq
        %v1401 = vshrl.u32 %v1400, 7
        %v1402 = vsub.s32 0, %v1401
        %v1403 = vrot.slane %v1377, %v1402
        %v1405 = vadd.f32 %v1398, %v1403
        %v1406 = vpack.c.bf16 %v1405, %v1405
        %v1407 = vld [vmem:[%s732] sm:$0xf]
        %v1408 = vld [vmem:[%s732 + $0x4] sm:$0xf]
        %v1409 = vld [vmem:[%s732 + $0x8] sm:$0xf]
        %v1410 = vld [vmem:[%s732 + $0xc] sm:$0xf]
        %v1411 = vld [vmem:[%s735] sm:$0x1]
        %v1413 = vlaneseq
        %v1414 = vshrl.u32 %v1413, 7
        %v1415 = vsub.s32 0, %v1414
        %v1416 = vrot.slane %v1411, %v1415
        %v1422 = vunpack.c.l.b16 %v1407
        %v1423 = vunpack.c.l.b16 %v1408
        %v1424 = vunpack.c.l.b16 %v1409
        %v1425 = vunpack.c.l.b16 %v1410
        %v1426 = vpack.c.b16 %v1423, %v1422
        %v1427 = vpack.c.b16 %v1425, %v1424
        %v1431 = vsel %vm791, %v1406, 0
        %1433 = vmatprep.subr.bf16.mxu0 0
        %1434 = vmatpush1.bf16.msra.mxu0 %v1426
        %1435 = vmatprep.subr.bf16.mxu0 0
        %1436 = vmatpush1.bf16.msra.mxu0 %v1427
        %1437 = vmatprep.subr.bf16.mxu0 0
        %1438 = vmatpush1.bf16.msra.mxu0 0
        %1439 = vmatprep.subr.bf16.mxu0 0
        %1440 = vmatpush1.bf16.msra.mxu0 0
        %1441 = vmatprep.subr.bf16.mxu0 0
        %1442 = vmatpush1.bf16.msra.mxu0 0
        %1443 = vmatprep.subr.bf16.mxu0 0
        %1444 = vmatpush1.bf16.msra.mxu0 0
        %1445 = vmatprep.subr.bf16.mxu0 0
        %1446 = vmatpush1.bf16.msra.mxu0 0
        %1447 = vmatprep.subr.bf16.mxu0 0
        %1448 = vmatpush1.bf16.msra.mxu0 0
        %1449 = vmatprep.subr.bf16.mxu0 0
        %1450 = vmatpush1.bf16.msra.mxu0 0
        %1451 = vmatprep.subr.bf16.mxu0 0
        %1452 = vmatpush1.bf16.msra.mxu0 0
        %1453 = vmatprep.subr.bf16.mxu0 0
        %1454 = vmatpush1.bf16.msra.mxu0 0
        %1455 = vmatprep.subr.bf16.mxu0 0
        %1456 = vmatpush1.bf16.msra.mxu0 0
        %1457 = vmatprep.subr.bf16.mxu0 0
        %1458 = vmatpush1.bf16.msra.mxu0 0
        %1459 = vmatprep.subr.bf16.mxu0 0
        %1460 = vmatpush1.bf16.msra.mxu0 0
        %1461 = vmatprep.subr.bf16.mxu0 0
        %1462 = vmatpush1.bf16.msra.mxu0 0
        %1463 = vmatprep.subr.bf16.mxu0 0
        %1464 = vmatpush1.bf16.msra.mxu0 0
        %1465 = vmatprep.mubr.bf16.mxu0 0
        %1466 = vmatmul.mubr.bf16.gmra.mrb[0].mxu0 %v1431
        %v1467 = vpop.f32.mrb[0].mxu0
        %v1468 = vadd.f32 %v1416, %v1467
        %v1469 = vpop.f32.mrb[0].mxu0
        %v1470 = vpop.f32.mrb[0].mxu0
        %v1471 = vpop.f32.mrb[0].mxu0
        %1472 = vdwg.mxu0
        %v1473 = vmax.f32 %v1468, 0.0
        %v1474 = vpack.c.bf16 %v1473, %v1473
        %v1475 = vld [vmem:[%s740] sm:$0xf]
        %v1476 = vld [vmem:[%s740 + $0x4] sm:$0xf]
        %v1477 = vld [vmem:[%s740 + $0x8] sm:$0xf]
        %v1478 = vld [vmem:[%s740 + $0xc] sm:$0xf]
        %v1479 = vld [vmem:[%s740 + $0x10] sm:$0xf]
        %v1480 = vld [vmem:[%s740 + $0x14] sm:$0xf]
        %v1481 = vld [vmem:[%s740 + $0x18] sm:$0xf]
        %v1482 = vld [vmem:[%s740 + $0x1c] sm:$0xf]
        %v1483 = vld [vmem:[%s743] sm:$0x1]
        %v1485 = vlaneseq
        %v1486 = vshrl.u32 %v1485, 7
        %v1487 = vsub.s32 0, %v1486
        %v1488 = vrot.slane %v1483, %v1487
        %v1498 = vunpack.c.l.b16 %v1475
        %v1499 = vunpack.c.l.b16 %v1476
        %v1500 = vunpack.c.l.b16 %v1477
        %v1501 = vunpack.c.l.b16 %v1478
        %v1502 = vunpack.c.l.b16 %v1479
        %v1503 = vunpack.c.l.b16 %v1480
        %v1504 = vunpack.c.l.b16 %v1481
        %v1505 = vunpack.c.l.b16 %v1482
        %v1506 = vpack.c.b16 %v1499, %v1498
        %v1507 = vpack.c.b16 %v1501, %v1500
        %v1508 = vpack.c.b16 %v1503, %v1502
        %v1509 = vpack.c.b16 %v1505, %v1504
        %vm1514 = vcmask 523264
        %v1516 = vsel %vm1514, %v1474, 0
        %1518 = vmatprep.subr.bf16.mxu0 0
        %1519 = vmatpush1.bf16.msra.mxu0 %v1506
        %1520 = vmatprep.subr.bf16.mxu0 0
        %1521 = vmatpush1.bf16.msra.mxu0 %v1507
        %1522 = vmatprep.subr.bf16.mxu0 0
        %1523 = vmatpush1.bf16.msra.mxu0 %v1508
        %1524 = vmatprep.subr.bf16.mxu0 0
        %1525 = vmatpush1.bf16.msra.mxu0 %v1509
        %1526 = vmatprep.subr.bf16.mxu0 0
        %1527 = vmatpush1.bf16.msra.mxu0 0
        %1528 = vmatprep.subr.bf16.mxu0 0
        %1529 = vmatpush1.bf16.msra.mxu0 0
        %1530 = vmatprep.subr.bf16.mxu0 0
        %1531 = vmatpush1.bf16.msra.mxu0 0
        %1532 = vmatprep.subr.bf16.mxu0 0
        %1533 = vmatpush1.bf16.msra.mxu0 0
        %1534 = vmatprep.subr.bf16.mxu0 0
        %1535 = vmatpush1.bf16.msra.mxu0 0
        %1536 = vmatprep.subr.bf16.mxu0 0
        %1537 = vmatpush1.bf16.msra.mxu0 0
        %1538 = vmatprep.subr.bf16.mxu0 0
        %1539 = vmatpush1.bf16.msra.mxu0 0
        %1540 = vmatprep.subr.bf16.mxu0 0
        %1541 = vmatpush1.bf16.msra.mxu0 0
        %1542 = vmatprep.subr.bf16.mxu0 0
        %1543 = vmatpush1.bf16.msra.mxu0 0
        %1544 = vmatprep.subr.bf16.mxu0 0
        %1545 = vmatpush1.bf16.msra.mxu0 0
        %1546 = vmatprep.subr.bf16.mxu0 0
        %1547 = vmatpush1.bf16.msra.mxu0 0
        %1548 = vmatprep.subr.bf16.mxu0 0
        %1549 = vmatpush1.bf16.msra.mxu0 0
        %1550 = vmatprep.mubr.bf16.mxu0 0
        %1551 = vmatmul.mubr.bf16.gmra.mrb[0].mxu0 %v1516
        %v1552 = vpop.f32.mrb[0].mxu0
        %v1553 = vadd.f32 %v1488, %v1552
        %v1554 = vpop.f32.mrb[0].mxu0
        %v1555 = vpop.f32.mrb[0].mxu0
        %v1556 = vpop.f32.mrb[0].mxu0
        %1557 = vdwg.mxu0
        %v1558 = vadd.f32 %v1405, %v1553
        %v1559 = vld [vmem:[%s752] sm:$0x1]
        %v1560 = vld [vmem:[%s755] sm:$0x1]
        %v1561 = vsel %vm791, %v1558, 0.0
        %1562 = vadd.xlane.f32.xlu0 %v1561
        %v1563 = vpop.xlane.xlu0 %1562
        %v1564 = vmul.f32 %v1563, %v1381
        %v1565 = vsub.f32 %v1558, %v1564
        %v1566 = vmul.f32 %v1565, %v1565
        %v1567 = vsel %vm791, %v1566, 0.0
        %1568 = vadd.xlane.f32.xlu0 %v1567
        %v1569 = vpop.xlane.xlu0 %1568
        %v1570 = vmul.f32 %v1569, %v1381
        %v1571 = vadd.f32 %v1570, 1e-05
        %v1572 = vrsqrt.pop %v1571
        %v1573 = vmul.f32 %v1565, %v1572
        %v1575 = vlaneseq
        %v1576 = vshrl.u32 %v1575, 7
        %v1577 = vsub.s32 0, %v1576
        %v1578 = vrot.slane %v1559, %v1577
        %v1580 = vmul.f32 %v1573, %v1578
        %v1582 = vlaneseq
        %v1583 = vshrl.u32 %v1582, 7
        %v1584 = vsub.s32 0, %v1583
        %v1585 = vrot.slane %v1560, %v1584
        %v1587 = vadd.f32 %v1580, %v1585
        %1588 = vst.msk [vmem:[#allocation2] sm:$0xff] %vm791, %v1587
        %p1589 = scmp.eq.s32.totalorder %s42, 1
        // Predicated region
        $region89: #{tpu_custom_call.1} parent=79 // pred_check
          %p1590 = pneg %p1589
        $region90: #{tpu_custom_call.1} parent=79 // pred_check_branch
          %1592 = sbr.rel (%p1590) target = $region92
        $region91: #{tpu_custom_call.1} parent=79 // pred_region
          %v1593 = vld [vmem:[%s13] sm:$0x1]
          %v1594 = vld [vmem:[%s14] sm:$0x1]
          %v1595 = vsel %vm791, %v1587, 0.0
          %1596 = vadd.xlane.f32.xlu0 %v1595
          %v1597 = vpop.xlane.xlu0 %1596
          %v1598 = vmul.f32 %v1597, %v1381
          %v1599 = vsub.f32 %v1587, %v1598
          %v1600 = vmul.f32 %v1599, %v1599
          %v1601 = vsel %vm791, %v1600, 0.0
          %1602 = vadd.xlane.f32.xlu0 %v1601
          %v1603 = vpop.xlane.xlu0 %1602
          %v1604 = vmul.f32 %v1603, %v1381
          %v1605 = vadd.f32 %v1604, 1e-05
          %v1606 = vrsqrt.pop %v1605
          %v1607 = vmul.f32 %v1599, %v1606
          %v1609 = vlaneseq
          %v1610 = vshrl.u32 %v1609, 7
          %v1611 = vsub.s32 0, %v1610
          %v1612 = vrot.slane %v1593, %v1611
          %v1614 = vmul.f32 %v1607, %v1612
          %v1616 = vlaneseq
          %v1617 = vshrl.u32 %v1616, 7
          %v1618 = vsub.s32 0, %v1617
          %v1619 = vrot.slane %v1594, %v1618
          %v1621 = vadd.f32 %v1614, %v1619
          %1622 = vst.msk [vmem:[%s704] sm:$0xff] %vm791, %v1621
        $region92: #{tpu_custom_call.1} parent=79 // pred_fallthru
          _
        %s1623 = sand.u32 %s437, 1
        %s1624 = scalar_lea.sflag [#allocation5], %s1623
        %s1625 = sand.u32 %s437, 1
        %s1626 = smul.addr %s1625, 8
        %s1627 = scalar_lea.vmem [#allocation6], %s1626
        %s1628 = sand.u32 %s467, 1
        %s1629 = scalar_lea.sflag [#allocation8], %s1628
        %s1630 = sand.u32 %s467, 1
        %s1631 = smul.addr %s1630, 32
        %s1632 = scalar_lea.vmem [#allocation7], %s1631
        // Predicated region
        $region93: #{tpu_custom_call.1} parent=79 // pred_check
          %p1633 = pneg %p447
        $region94: #{tpu_custom_call.1} parent=79 // pred_check_branch
          %1635 = sbr.rel (%p1633) target = $region96
        $region95: #{tpu_custom_call.1} parent=79 // pred_region
          %s1637 = ssub.s32 128, 128
          %1638 = vsyncadd %s1624, %s1637
          %s1639 = smul.addr %s41, 128
          %s1640 = scalar_lea.hbm %s15, %s1639
          %s1642 = sshll.u32 %s1627, 4
          %s1643 = int_to_ptr.vmem [resolvable:$true] %s1642
          %1645 = dma.vmem_to_hbm [thread:$0]  %s1643, 128, %s1640, %s1624
        $region96: #{tpu_custom_call.1} parent=79 // pred_fallthru
          _
        // Predicated region
        $region97: #{tpu_custom_call.1} parent=79 // pred_check
          %p1646 = pneg %p477
        $region98: #{tpu_custom_call.1} parent=79 // pred_check_branch
          %1648 = sbr.rel (%p1646) target = $region100
        $region99: #{tpu_custom_call.1} parent=79 // pred_region
          %s1649 = smul.u32 %s42, 2
          %s1650 = sadd.s32 %s1649, %s41
          %s1652 = ssub.s32 512, 512
          %1653 = vsyncadd %s1629, %s1652
          %s1654 = smul.addr %s1650, 4
          %s1655 = smul.addr %s1654, 128
          %s1656 = scalar_lea.hbm %s16, %s1655
          %s1657 = sshll.u32 %s1632, 4
          %s1658 = int_to_ptr.vmem [resolvable:$true] %s1657
          %1663 = dma.vmem_to_hbm [thread:$0]  %s1658, 512, %s1656, %s1629, 128, 128, 8
        $region100: #{tpu_custom_call.1} parent=79 // pred_fallthru
          _
      $region80: #{tpu_custom_call.1} parent=5 // pred_fallthru
        _
      %p1664 = scmp.le.s32.totalorder 2, %s32
      // Predicated region
      $region101: #{tpu_custom_call.1} parent=5 // pred_check
        %p1665 = pneg %p1664
      $region102: #{tpu_custom_call.1} parent=5 // pred_check_branch
        %1667 = sbr.rel (%p1665) target = $region104
      $region103: #{tpu_custom_call.1} parent=5 // pred_region
        %s1668 = ssub.s32 %s32, 2
        // Predicated region
        $region105: #{tpu_custom_call.1} parent=103 // pred_check
          %p1669 = pneg %p453
        $region106: #{tpu_custom_call.1} parent=103 // pred_check_branch
          %1671 = sbr.rel (%p1669) target = $region108
        $region107: #{tpu_custom_call.1} parent=103 // pred_region
          %s1672 = sand.u32 %s438, 1
          %s1673 = scalar_lea.sflag [#allocation5], %s1672
          %s1674 = sand.u32 %s438, 1
          %s1675 = smul.addr %s1674, 8
          %s1676 = scalar_lea.vmem [#allocation6], %s1675
          %1677 = dma.done %s1673, 128
        $region108: #{tpu_custom_call.1} parent=103 // pred_fallthru
          _
        // Predicated region
        $region109: #{tpu_custom_call.1} parent=103 // pred_check
          %p1678 = pneg %p483
        $region110: #{tpu_custom_call.1} parent=103 // pred_check_branch
          %1680 = sbr.rel (%p1678) target = $region112
        $region111: #{tpu_custom_call.1} parent=103 // pred_region
          %s1681 = sand.u32 %s468, 1
          %s1682 = scalar_lea.sflag [#allocation8], %s1681
          %s1683 = sand.u32 %s468, 1
          %s1684 = smul.addr %s1683, 32
          %s1685 = scalar_lea.vmem [#allocation7], %s1684
          %1686 = dma.done %s1682, 512
        $region112: #{tpu_custom_call.1} parent=103 // pred_fallthru
          _
      $region104: #{tpu_custom_call.1} parent=5 // pred_fallthru
        _
    $region6: #{tpu_custom_call.1} parent=1 // loop_footer
      %s36 = sadd.s32 1, %s32
    $region7: #{tpu_custom_call.1} parent=1 // loop_footer_branch
      %31 = sbr.rel target = $region3
    $region8: #{tpu_custom_call.1} parent=1 // loop_exit
      _
    %1687 = vsyncpa [#allocation4], 1
    %s1688 = scalar_lea.sflag [#allocation4], 1
    %1689 = vsyncpa %s1688, 1
    %1690 = vsyncpa [#allocation5], 1
    %s1691 = scalar_lea.sflag [#allocation5], 1
    %1692 = vsyncpa %s1691, 1
    %1693 = vsyncpa [#allocation8], 1
    %s1694 = scalar_lea.sflag [#allocation8], 1
    %1695 = vsyncpa %s1694, 1

</llo_original>
